<compile_context>
chip_gen: v6e
topology: v6e:2x2x1
jax: 0.10.0
libtpu: 0.0.40
codegen_flags: <defaults>
</compile_context>

<pallas_src>
import functools

import jax
import jax.numpy as jnp
from jax.experimental import pallas as pl
from jax.experimental.pallas import tpu as pltpu

EPS = 1e-8      # nn.CosineSimilarity default eps
_ALIGN = 16     # batch-tile alignment (multiple of 8 for f32, 16 for bf16 rows)


def _round_up(x, m):
    return ((x + m - 1) // m) * m


def _is_two_tensorcore_chip():
    """True on chips with 2 TensorCores per chip (v4 / v5p / v7x).

    Only used to decide whether to split the batch grid into >= 2 "parallel"
    steps so Mosaic can shard it across both cores; imperfect detection only
    costs a little performance, never correctness.
    """
    try:
        kind = jax.devices()[0].device_kind.lower()
    except Exception:  # pragma: no cover - defensive, e.g. odd backends
        return False
    return any(tag in kind for tag in ("v7", "v4", "v5p"))


def _sim_kernel(d1_ref, d2_ref, w1_ref, b1_ref, w2_ref, b2_ref, w3_ref, b3_ref,
                out_ref, *, use_bf16):
    """Shared 3-layer ReLU MLP on each embedding + cosine similarity.

    d1_ref, d2_ref : [TB, 768] (f32, or bf16 when use_bf16)
    w1 [768,512] b1 [1,512] | w2 [512,256] b2 [1,256] | w3 [256,128] b3 [1,128]
      (weights already bf16 when use_bf16; biases always f32)
    out_ref        : [TB, 1] f32
    """

    def mlp(x):
        h = x
        for w_ref, b_ref in ((w1_ref, b1_ref), (w2_ref, b2_ref), (w3_ref, b3_ref)):
            # MXU operands in bf16 (no-op for layer 1 whose input is already
            # bf16); accumulate, bias-add and ReLU in f32.
            lhs = h.astype(jnp.bfloat16) if use_bf16 else h
            h = jnp.dot(lhs, w_ref[...], preferred_element_type=jnp.float32)
            h = jnp.maximum(h + b_ref[...], 0.0)
        return h                                              # [TB, 128] f32

    f1 = mlp(d1_ref[...])
    f2 = mlp(d2_ref[...])

    dot = jnp.sum(f1 * f2, axis=-1, keepdims=True)            # [TB, 1]
    n1sq = jnp.sum(f1 * f1, axis=-1, keepdims=True)
    n2sq = jnp.sum(f2 * f2, axis=-1, keepdims=True)
    # torch.nn.CosineSimilarity: x1.x2 / (max(||x1||, eps) * max(||x2||, eps))
    # == x1.x2 * rsqrt(max(||x1||^2, eps^2) * max(||x2||^2, eps^2))
    eps2 = jnp.float32(EPS * EPS)
    inv_denom = jax.lax.rsqrt(jnp.maximum(n1sq, eps2) * jnp.maximum(n2sq, eps2))

    out_ref[...] = dot * inv_denom                            # [TB, 1]


@functools.partial(jax.jit, static_argnames=("block_b", "use_bf16"))
def bert_similarity(d1, d2, w1, b1, w2, b2, w3, b3, *, block_b=512,
                    use_bf16=True):
    B, D = d1.shape
    assert d1.shape == d2.shape and D == 768

    # Batch tile: no bigger than the (aligned) batch.  Only on 2-TC chips do
    # we cap it so the "parallel" batch axis keeps >= 2 grid steps; on
    # single-TC v5e/v6e extra steps are pure per-step overhead.
    tb = min(block_b, _round_up(B, _ALIGN))
    if _is_two_tensorcore_chip() and B > 128:
        tb = min(tb, _round_up(pl.cdiv(B, 2), _ALIGN))

    grid_len = pl.cdiv(B, tb)
    b_pad = grid_len * tb
    if b_pad != B:
        pad = b_pad - B
        d1 = jnp.pad(d1, ((0, pad), (0, 0)))
        d2 = jnp.pad(d2, ((0, pad), (0, 0)))

    if use_bf16:
        # Cast once in the wrapper: halves embedding + weight DMA / VMEM and
        # removes per-tile casts inside the kernel.
        d1 = d1.astype(jnp.bfloat16)
        d2 = d2.astype(jnp.bfloat16)
        w1 = w1.astype(jnp.bfloat16)
        w2 = w2.astype(jnp.bfloat16)
        w3 = w3.astype(jnp.bfloat16)

    emb_spec = pl.BlockSpec((tb, 768), lambda i: (i, 0))
    # Weights / biases replicated across the batch grid (constant index_map ->
    # fetched once and revisited, not re-DMA'd every step).
    w_spec = lambda shape: pl.BlockSpec(shape, lambda i: (0, 0))

    kernel = functools.partial(_sim_kernel, use_bf16=use_bf16)

    out = pl.pallas_call(
        kernel,
        out_shape=jax.ShapeDtypeStruct((b_pad, 1), jnp.float32),
        grid_spec=pltpu.PrefetchScalarGridSpec(
            num_scalar_prefetch=0,
            grid=(grid_len,),
            in_specs=[
                emb_spec,                 # desc1
                emb_spec,                 # desc2
                w_spec((768, 512)),       # w1
                w_spec((1, 512)),         # b1
                w_spec((512, 256)),       # w2
                w_spec((1, 256)),         # b2
                w_spec((256, 128)),       # w3
                w_spec((1, 128)),         # b3
            ],
            out_specs=pl.BlockSpec((tb, 1), lambda i: (i, 0)),
        ),
        compiler_params=pltpu.CompilerParams(
            dimension_semantics=("parallel",),
            vmem_limit_bytes=32 * 1024 * 1024,
        ),
    )(d1, d2, w1, b1, w2, b2, w3, b3)

    return out[:B, 0]   # [B]


def init_params(key):
    """Deterministic synthetic parameters matching the module's Linear shapes."""
    k1, k2, k3, k4, k5, k6 = jax.random.split(key, 6)
    # Stored as [in, out]; PyTorch Linear weight would be the transpose.
    w1 = jax.random.normal(k1, (768, 512), jnp.float32) * 0.03
    b1 = jax.random.normal(k2, (1, 512), jnp.float32) * 0.01
    w2 = jax.random.normal(k3, (512, 256), jnp.float32) * 0.03
    b2 = jax.random.normal(k4, (1, 256), jnp.float32) * 0.01
    w3 = jax.random.normal(k5, (256, 128), jnp.float32) * 0.03
    b3 = jax.random.normal(k6, (1, 128), jnp.float32) * 0.01
    return w1, b1, w2, b2, w3, b3


def reference(d1, d2, w1, b1, w2, b2, w3, b3):
    def mlp(x):
        h = jax.nn.relu(x @ w1 + b1)
        h = jax.nn.relu(h @ w2 + b2)
        h = jax.nn.relu(h @ w3 + b3)
        return h
    f1, f2 = mlp(d1), mlp(d2)
    num = jnp.sum(f1 * f2, axis=1)
    den = jnp.maximum(jnp.linalg.norm(f1, axis=1), EPS) * \
          jnp.maximum(jnp.linalg.norm(f2, axis=1), EPS)
    return num / den


if __name__ == "__main__":
    key = jax.random.PRNGKey(0)
    k_in1, k_in2, k_params = jax.random.split(key, 3)
    params = init_params(k_params)

    # Small primary check (B = 8): default bf16-operand path and f32 path.
    B = 8
    desc1 = jax.random.normal(k_in1, (B, 768), jnp.float32)
    desc2 = jax.random.normal(k_in2, (B, 768), jnp.float32)
    ref = reference(desc1, desc2, *params)

    sim = jax.block_until_ready(bert_similarity(desc1, desc2, *params))
    assert sim.shape == (B,)
    assert jnp.allclose(sim, ref, atol=3e-2, rtol=3e-2), (sim, ref)

    sim_f32 = jax.block_until_ready(
        bert_similarity(desc1, desc2, *params, use_bf16=False))
    assert jnp.allclose(sim_f32, ref, atol=1e-5, rtol=1e-5), (sim_f32, ref)

    # Non-multiple batch exercises the cdiv + padding path (f32, tight check).
    B2 = 37
    d1b = jax.random.normal(jax.random.PRNGKey(7), (B2, 768), jnp.float32)
    d2b = jax.random.normal(jax.random.PRNGKey(11), (B2, 768), jnp.float32)
    sim2 = jax.block_until_ready(
        bert_similarity(d1b, d2b, *params, use_bf16=False))
    ref2 = reference(d1b, d2b, *params)
    assert sim2.shape == (B2,)
    assert jnp.allclose(sim2, ref2, atol=1e-5, rtol=1e-5), (sim2, ref2)

    # Multi-step batch grid + padding (forced smaller tile), default bf16 path.
    B3 = 600
    d1c = jax.random.normal(jax.random.PRNGKey(13), (B3, 768), jnp.float32)
    d2c = jax.random.normal(jax.random.PRNGKey(17), (B3, 768), jnp.float32)
    sim3 = jax.block_until_ready(
        bert_similarity(d1c, d2c, *params, block_b=256))
    ref3 = reference(d1c, d2c, *params)
    assert sim3.shape == (B3,)
    assert jnp.allclose(sim3, ref3, atol=3e-2, rtol=3e-2), (sim3, ref3)

    print("KERNEL_OK")
</pallas_src>

<mosaic_0001>
module attributes {stable_mosaic.version = 11 : i64} {
  func.func @_sim_kernel(%arg0: i32, %arg1: memref<16x768xbf16, #tpu.memory_space<vmem>>, %arg2: memref<16x768xbf16, #tpu.memory_space<vmem>>, %arg3: memref<768x512xbf16, #tpu.memory_space<vmem>>, %arg4: memref<1x512xf32, #tpu.memory_space<vmem>>, %arg5: memref<512x256xbf16, #tpu.memory_space<vmem>>, %arg6: memref<1x256xf32, #tpu.memory_space<vmem>>, %arg7: memref<256x128xbf16, #tpu.memory_space<vmem>>, %arg8: memref<1x128xf32, #tpu.memory_space<vmem>>, %arg9: memref<16x1xf32, #tpu.memory_space<vmem>>) attributes {dimension_semantics = [#tpu.dimension_semantics<parallel>], iteration_bounds = array<i64: 1>, scalar_prefetch = 0 : i64, scratch_operands = 0 : i64, tpu.core_type = #tpu.core_type<tc>, window_params = [{transform_indices = @transform_0, window_bounds = array<i64: 16, 768>}, {transform_indices = @transform_1, window_bounds = array<i64: 16, 768>}, {pipeline_mode = #tpu.pipeline_mode<synchronous>, transform_indices = @transform_2, window_bounds = array<i64: 768, 512>}, {pipeline_mode = #tpu.pipeline_mode<synchronous>, transform_indices = @transform_3, window_bounds = array<i64: 1, 512>}, {pipeline_mode = #tpu.pipeline_mode<synchronous>, transform_indices = @transform_4, window_bounds = array<i64: 512, 256>}, {pipeline_mode = #tpu.pipeline_mode<synchronous>, transform_indices = @transform_5, window_bounds = array<i64: 1, 256>}, {pipeline_mode = #tpu.pipeline_mode<synchronous>, transform_indices = @transform_6, window_bounds = array<i64: 256, 128>}, {pipeline_mode = #tpu.pipeline_mode<synchronous>, transform_indices = @transform_7, window_bounds = array<i64: 1, 128>}, {transform_indices = @transform_8, window_bounds = array<i64: 16, 1>}]} {
    %c0 = arith.constant 0 : index
    %c0_0 = arith.constant 0 : index
    %0 = vector.load %arg1[%c0, %c0_0] : memref<16x768xbf16, #tpu.memory_space<vmem>>, vector<16x768xbf16>
    %c0_1 = arith.constant 0 : index
    %c0_2 = arith.constant 0 : index
    %1 = vector.load %arg3[%c0_1, %c0_2] : memref<768x512xbf16, #tpu.memory_space<vmem>>, vector<768x512xbf16>
    %cst = arith.constant dense<0.000000e+00> : vector<16x512xf32>
    %2 = tpu.matmul %0, %1, %cst {dimension_numbers = #tpu.dot_dimension_numbers<[1], [0], [0], [1], [0, 0, 1, 1], [], []>} : vector<16x768xbf16>, vector<768x512xbf16>, vector<16x512xf32> -> vector<16x512xf32>
    %c0_3 = arith.constant 0 : index
    %c0_4 = arith.constant 0 : index
    %3 = vector.load %arg4[%c0_3, %c0_4] : memref<1x512xf32, #tpu.memory_space<vmem>>, vector<1x512xf32>
    %4 = vector.broadcast %3 : vector<1x512xf32> to vector<16x512xf32>
    %5 = arith.addf %2, %4 : vector<16x512xf32>
    %cst_5 = arith.constant 0.000000e+00 : f32
    %6 = vector.broadcast %cst_5 : f32 to vector<16x512xf32>
    %7 = arith.maximumf %5, %6 : vector<16x512xf32>
    %8 = arith.truncf %7 : vector<16x512xf32> to vector<16x512xbf16>
    %c0_6 = arith.constant 0 : index
    %c0_7 = arith.constant 0 : index
    %9 = vector.load %arg5[%c0_6, %c0_7] : memref<512x256xbf16, #tpu.memory_space<vmem>>, vector<512x256xbf16>
    %cst_8 = arith.constant dense<0.000000e+00> : vector<16x256xf32>
    %10 = tpu.matmul %8, %9, %cst_8 {dimension_numbers = #tpu.dot_dimension_numbers<[1], [0], [0], [1], [0, 0, 1, 1], [], []>} : vector<16x512xbf16>, vector<512x256xbf16>, vector<16x256xf32> -> vector<16x256xf32>
    %c0_9 = arith.constant 0 : index
    %c0_10 = arith.constant 0 : index
    %11 = vector.load %arg6[%c0_9, %c0_10] : memref<1x256xf32, #tpu.memory_space<vmem>>, vector<1x256xf32>
    %12 = vector.broadcast %11 : vector<1x256xf32> to vector<16x256xf32>
    %13 = arith.addf %10, %12 : vector<16x256xf32>
    %cst_11 = arith.constant 0.000000e+00 : f32
    %14 = vector.broadcast %cst_11 : f32 to vector<16x256xf32>
    %15 = arith.maximumf %13, %14 : vector<16x256xf32>
    %16 = arith.truncf %15 : vector<16x256xf32> to vector<16x256xbf16>
    %c0_12 = arith.constant 0 : index
    %c0_13 = arith.constant 0 : index
    %17 = vector.load %arg7[%c0_12, %c0_13] : memref<256x128xbf16, #tpu.memory_space<vmem>>, vector<256x128xbf16>
    %cst_14 = arith.constant dense<0.000000e+00> : vector<16x128xf32>
    %18 = tpu.matmul %16, %17, %cst_14 {dimension_numbers = #tpu.dot_dimension_numbers<[1], [0], [0], [1], [0, 0, 1, 1], [], []>} : vector<16x256xbf16>, vector<256x128xbf16>, vector<16x128xf32> -> vector<16x128xf32>
    %c0_15 = arith.constant 0 : index
    %c0_16 = arith.constant 0 : index
    %19 = vector.load %arg8[%c0_15, %c0_16] : memref<1x128xf32, #tpu.memory_space<vmem>>, vector<1x128xf32>
    %20 = vector.broadcast %19 : vector<1x128xf32> to vector<16x128xf32>
    %21 = arith.addf %18, %20 : vector<16x128xf32>
    %cst_17 = arith.constant 0.000000e+00 : f32
    %22 = vector.broadcast %cst_17 : f32 to vector<16x128xf32>
    %23 = arith.maximumf %21, %22 : vector<16x128xf32>
    %c0_18 = arith.constant 0 : index
    %c0_19 = arith.constant 0 : index
    %24 = vector.load %arg2[%c0_18, %c0_19] : memref<16x768xbf16, #tpu.memory_space<vmem>>, vector<16x768xbf16>
    %c0_20 = arith.constant 0 : index
    %c0_21 = arith.constant 0 : index
    %25 = vector.load %arg3[%c0_20, %c0_21] : memref<768x512xbf16, #tpu.memory_space<vmem>>, vector<768x512xbf16>
    %cst_22 = arith.constant dense<0.000000e+00> : vector<16x512xf32>
    %26 = tpu.matmul %24, %25, %cst_22 {dimension_numbers = #tpu.dot_dimension_numbers<[1], [0], [0], [1], [0, 0, 1, 1], [], []>} : vector<16x768xbf16>, vector<768x512xbf16>, vector<16x512xf32> -> vector<16x512xf32>
    %c0_23 = arith.constant 0 : index
    %c0_24 = arith.constant 0 : index
    %27 = vector.load %arg4[%c0_23, %c0_24] : memref<1x512xf32, #tpu.memory_space<vmem>>, vector<1x512xf32>
    %28 = vector.broadcast %27 : vector<1x512xf32> to vector<16x512xf32>
    %29 = arith.addf %26, %28 : vector<16x512xf32>
    %cst_25 = arith.constant 0.000000e+00 : f32
    %30 = vector.broadcast %cst_25 : f32 to vector<16x512xf32>
    %31 = arith.maximumf %29, %30 : vector<16x512xf32>
    %32 = arith.truncf %31 : vector<16x512xf32> to vector<16x512xbf16>
    %c0_26 = arith.constant 0 : index
    %c0_27 = arith.constant 0 : index
    %33 = vector.load %arg5[%c0_26, %c0_27] : memref<512x256xbf16, #tpu.memory_space<vmem>>, vector<512x256xbf16>
    %cst_28 = arith.constant dense<0.000000e+00> : vector<16x256xf32>
    %34 = tpu.matmul %32, %33, %cst_28 {dimension_numbers = #tpu.dot_dimension_numbers<[1], [0], [0], [1], [0, 0, 1, 1], [], []>} : vector<16x512xbf16>, vector<512x256xbf16>, vector<16x256xf32> -> vector<16x256xf32>
    %c0_29 = arith.constant 0 : index
    %c0_30 = arith.constant 0 : index
    %35 = vector.load %arg6[%c0_29, %c0_30] : memref<1x256xf32, #tpu.memory_space<vmem>>, vector<1x256xf32>
    %36 = vector.broadcast %35 : vector<1x256xf32> to vector<16x256xf32>
    %37 = arith.addf %34, %36 : vector<16x256xf32>
    %cst_31 = arith.constant 0.000000e+00 : f32
    %38 = vector.broadcast %cst_31 : f32 to vector<16x256xf32>
    %39 = arith.maximumf %37, %38 : vector<16x256xf32>
    %40 = arith.truncf %39 : vector<16x256xf32> to vector<16x256xbf16>
    %c0_32 = arith.constant 0 : index
    %c0_33 = arith.constant 0 : index
    %41 = vector.load %arg7[%c0_32, %c0_33] : memref<256x128xbf16, #tpu.memory_space<vmem>>, vector<256x128xbf16>
    %cst_34 = arith.constant dense<0.000000e+00> : vector<16x128xf32>
    %42 = tpu.matmul %40, %41, %cst_34 {dimension_numbers = #tpu.dot_dimension_numbers<[1], [0], [0], [1], [0, 0, 1, 1], [], []>} : vector<16x256xbf16>, vector<256x128xbf16>, vector<16x128xf32> -> vector<16x128xf32>
    %c0_35 = arith.constant 0 : index
    %c0_36 = arith.constant 0 : index
    %43 = vector.load %arg8[%c0_35, %c0_36] : memref<1x128xf32, #tpu.memory_space<vmem>>, vector<1x128xf32>
    %44 = vector.broadcast %43 : vector<1x128xf32> to vector<16x128xf32>
    %45 = arith.addf %42, %44 : vector<16x128xf32>
    %cst_37 = arith.constant 0.000000e+00 : f32
    %46 = vector.broadcast %cst_37 : f32 to vector<16x128xf32>
    %47 = arith.maximumf %45, %46 : vector<16x128xf32>
    %48 = arith.mulf %23, %47 : vector<16x128xf32>
    %cst_38 = arith.constant dense<0.000000e+00> : vector<16xf32>
    %49 = vector.multi_reduction <add>, %48, %cst_38 [1] : vector<16x128xf32> to vector<16xf32>
    %50 = vector.shape_cast %49 : vector<16xf32> to vector<16x1xf32>
    %51 = arith.mulf %23, %23 : vector<16x128xf32>
    %cst_39 = arith.constant dense<0.000000e+00> : vector<16xf32>
    %52 = vector.multi_reduction <add>, %51, %cst_39 [1] : vector<16x128xf32> to vector<16xf32>
    %53 = vector.shape_cast %52 : vector<16xf32> to vector<16x1xf32>
    %54 = arith.mulf %47, %47 : vector<16x128xf32>
    %cst_40 = arith.constant dense<0.000000e+00> : vector<16xf32>
    %55 = vector.multi_reduction <add>, %54, %cst_40 [1] : vector<16x128xf32> to vector<16xf32>
    %56 = vector.shape_cast %55 : vector<16xf32> to vector<16x1xf32>
    %cst_41 = arith.constant 1.000000e-16 : f32
    %57 = vector.broadcast %cst_41 : f32 to vector<16x1xf32>
    %58 = arith.maximumf %53, %57 : vector<16x1xf32>
    %cst_42 = arith.constant 1.000000e-16 : f32
    %59 = vector.broadcast %cst_42 : f32 to vector<16x1xf32>
    %60 = arith.maximumf %56, %59 : vector<16x1xf32>
    %61 = arith.mulf %58, %60 : vector<16x1xf32>
    %62 = math.rsqrt %61 : vector<16x1xf32>
    %63 = arith.mulf %50, %62 : vector<16x1xf32>
    %c0_43 = arith.constant 0 : index
    %c0_44 = arith.constant 0 : index
    %64 = vector.load %arg9[%c0_43, %c0_44] : memref<16x1xf32, #tpu.memory_space<vmem>>, vector<16x1xf32>
    tpu.vector_store %arg9[%c0_43, %c0_44], %63 {strides = array<i32>} : memref<16x1xf32, #tpu.memory_space<vmem>>, vector<16x1xf32>,
    return
  }
  func.func @transform_0(%arg0: i32) -> (i32, i32) {
    %c0_i32 = arith.constant 0 : i32
    %c0_i32_0 = arith.constant 0 : i32
    return %arg0, %c0_i32 : i32, i32
  }
  func.func @transform_1(%arg0: i32) -> (i32, i32) {
    %c0_i32 = arith.constant 0 : i32
    %c0_i32_0 = arith.constant 0 : i32
    return %arg0, %c0_i32 : i32, i32
  }
  func.func @transform_2(%arg0: i32) -> (i32, i32) {
    %c0_i32 = arith.constant 0 : i32
    %c0_i32_0 = arith.constant 0 : i32
    %c0_i32_1 = arith.constant 0 : i32
    return %c0_i32, %c0_i32_0 : i32, i32
  }
  func.func @transform_3(%arg0: i32) -> (i32, i32) {
    %c0_i32 = arith.constant 0 : i32
    %c0_i32_0 = arith.constant 0 : i32
    %c0_i32_1 = arith.constant 0 : i32
    return %c0_i32, %c0_i32_0 : i32, i32
  }
  func.func @transform_4(%arg0: i32) -> (i32, i32) {
    %c0_i32 = arith.constant 0 : i32
    %c0_i32_0 = arith.constant 0 : i32
    %c0_i32_1 = arith.constant 0 : i32
    return %c0_i32, %c0_i32_0 : i32, i32
  }
  func.func @transform_5(%arg0: i32) -> (i32, i32) {
    %c0_i32 = arith.constant 0 : i32
    %c0_i32_0 = arith.constant 0 : i32
    %c0_i32_1 = arith.constant 0 : i32
    return %c0_i32, %c0_i32_0 : i32, i32
  }
  func.func @transform_6(%arg0: i32) -> (i32, i32) {
    %c0_i32 = arith.constant 0 : i32
    %c0_i32_0 = arith.constant 0 : i32
    %c0_i32_1 = arith.constant 0 : i32
    return %c0_i32, %c0_i32_0 : i32, i32
  }
  func.func @transform_7(%arg0: i32) -> (i32, i32) {
    %c0_i32 = arith.constant 0 : i32
    %c0_i32_0 = arith.constant 0 : i32
    %c0_i32_1 = arith.constant 0 : i32
    return %c0_i32, %c0_i32_0 : i32, i32
  }
  func.func @transform_8(%arg0: i32) -> (i32, i32) {
    %c0_i32 = arith.constant 0 : i32
    %c0_i32_0 = arith.constant 0 : i32
    return %arg0, %c0_i32 : i32, i32
  }
}

</mosaic_0001>

<llo_original>
// kernel: bert_similarity.1
$region0: #{bert_similarity.1}
  #allocation0 [shape = 'u32[]', space=smem, size = 0x4, offset = 0x4, fixed_abs, tag = 'smem constant byte address 0x4 - core index']
  #allocation1 [shape = 'u32[144,128]{1,0:T(1,128)}', space=vmem, size = 0x12000, scoped, tag = 'internal scratch']
  %s0 = inlined_call_operand.vmem [shape: bf16[16,768], index: 0, kind: input, shape index: {}]
  %s1 = inlined_call_operand.vmem [shape: bf16[16,768], index: 1, kind: input, shape index: {}]
  %s2 = inlined_call_operand.vmem [shape: bf16[768,512], index: 2, kind: input, shape index: {}]
  %s3 = inlined_call_operand.vmem [shape: f32[1,512], index: 3, kind: input, shape index: {}]
  %s4 = inlined_call_operand.vmem [shape: bf16[512,256], index: 4, kind: input, shape index: {}]
  %s5 = inlined_call_operand.vmem [shape: f32[1,256], index: 5, kind: input, shape index: {}]
  %s6 = inlined_call_operand.vmem [shape: bf16[256,128], index: 6, kind: input, shape index: {}]
  %s7 = inlined_call_operand.vmem [shape: f32[1,128], index: 7, kind: input, shape index: {}]
  %s8 = inlined_call_operand.vmem [shape: f32[16,1], index: 8, kind: output, shape index: {}]
  %s9 = sld [smem:[#allocation0]]
  $region42: #{bert_similarity.1} parent=0
    _
  %s11 = ssub.s32 1, %s9
  %s12 = scalar_select 0, %s11, %s9
  // Predicated region
  $region2: #{bert_similarity.1} parent=0 // pred_check
    _
  $region3: #{bert_similarity.1} parent=0 // pred_check_branch
    %14 = sbr.rel (0) target = $region5
  $region4: #{bert_similarity.1} parent=0 // pred_region
    _
  $region5: #{bert_similarity.1} parent=0 // pred_fallthru
    _
  // Predicated region
  $region6: #{bert_similarity.1} parent=0 // pred_check
    _
  $region7: #{bert_similarity.1} parent=0 // pred_check_branch
    %16 = sbr.rel (0) target = $region9
  $region8: #{bert_similarity.1} parent=0 // pred_region
    _
  $region9: #{bert_similarity.1} parent=0 // pred_fallthru
    _
  // Predicated region
  $region10: #{bert_similarity.1} parent=0 // pred_check
    _
  $region11: #{bert_similarity.1} parent=0 // pred_check_branch
    %18 = sbr.rel (0) target = $region13
  $region12: #{bert_similarity.1} parent=0 // pred_region
    _
  $region13: #{bert_similarity.1} parent=0 // pred_fallthru
    _
  // Predicated region
  $region14: #{bert_similarity.1} parent=0 // pred_check
    _
  $region15: #{bert_similarity.1} parent=0 // pred_check_branch
    %20 = sbr.rel (0) target = $region17
  $region16: #{bert_similarity.1} parent=0 // pred_region
    _
  $region17: #{bert_similarity.1} parent=0 // pred_fallthru
    _
  // Predicated region
  $region18: #{bert_similarity.1} parent=0 // pred_check
    _
  $region19: #{bert_similarity.1} parent=0 // pred_check_branch
    %22 = sbr.rel (0) target = $region21
  $region20: #{bert_similarity.1} parent=0 // pred_region
    _
  $region21: #{bert_similarity.1} parent=0 // pred_fallthru
    _
  // Predicated region
  $region22: #{bert_similarity.1} parent=0 // pred_check
    _
  $region23: #{bert_similarity.1} parent=0 // pred_check_branch
    %24 = sbr.rel (0) target = $region25
  $region24: #{bert_similarity.1} parent=0 // pred_region
    _
  $region25: #{bert_similarity.1} parent=0 // pred_fallthru
    _
  // Predicated region
  $region26: #{bert_similarity.1} parent=0 // pred_check
    _
  $region27: #{bert_similarity.1} parent=0 // pred_check_branch
    %26 = sbr.rel (0) target = $region29
  $region28: #{bert_similarity.1} parent=0 // pred_region
    _
  $region29: #{bert_similarity.1} parent=0 // pred_fallthru
    _
  // Predicated region
  $region30: #{bert_similarity.1} parent=0 // pred_check
    _
  $region31: #{bert_similarity.1} parent=0 // pred_check_branch
    %28 = sbr.rel (0) target = $region33
  $region32: #{bert_similarity.1} parent=0 // pred_region
    _
  $region33: #{bert_similarity.1} parent=0 // pred_fallthru
    _
  %v30 = vld [vmem:[%s0] sm:$0xff]
  %v31 = vld [vmem:[%s0 + $0x8] sm:$0xff]
  %v32 = vld [vmem:[%s0 + $0x10] sm:$0xff]
  %v33 = vld [vmem:[%s0 + $0x18] sm:$0xff]
  %v34 = vld [vmem:[%s0 + $0x20] sm:$0xff]
  %v35 = vld [vmem:[%s0 + $0x28] sm:$0xff]
  %v36 = vld [vmem:[%s2] sm:$0xff]
  %v37 = vld [vmem:[%s2 + $0x8] sm:$0xff]
  %v38 = vld [vmem:[%s2 + $0x10] sm:$0xff]
  %v39 = vld [vmem:[%s2 + $0x18] sm:$0xff]
  %v40 = vld [vmem:[%s2 + $0x20] sm:$0xff]
  %v41 = vld [vmem:[%s2 + $0x28] sm:$0xff]
  %v42 = vld [vmem:[%s2 + $0x30] sm:$0xff]
  %v43 = vld [vmem:[%s2 + $0x38] sm:$0xff]
  %v44 = vld [vmem:[%s2 + $0x40] sm:$0xff]
  %v45 = vld [vmem:[%s2 + $0x48] sm:$0xff]
  %v46 = vld [vmem:[%s2 + $0x50] sm:$0xff]
  %v47 = vld [vmem:[%s2 + $0x58] sm:$0xff]
  %v48 = vld [vmem:[%s2 + $0x60] sm:$0xff]
  %v49 = vld [vmem:[%s2 + $0x68] sm:$0xff]
  %v50 = vld [vmem:[%s2 + $0x70] sm:$0xff]
  %v51 = vld [vmem:[%s2 + $0x78] sm:$0xff]
  %v52 = vld [vmem:[%s2 + $0x80] sm:$0xff]
  %v53 = vld [vmem:[%s2 + $0x88] sm:$0xff]
  %v54 = vld [vmem:[%s2 + $0x90] sm:$0xff]
  %v55 = vld [vmem:[%s2 + $0x98] sm:$0xff]
  %v56 = vld [vmem:[%s2 + $0xa0] sm:$0xff]
  %v57 = vld [vmem:[%s2 + $0xa8] sm:$0xff]
  %v58 = vld [vmem:[%s2 + $0xb0] sm:$0xff]
  %v59 = vld [vmem:[%s2 + $0xb8] sm:$0xff]
  %v60 = vld [vmem:[%s2 + $0xc0] sm:$0xff]
  %v61 = vld [vmem:[%s2 + $0xc8] sm:$0xff]
  %v62 = vld [vmem:[%s2 + $0xd0] sm:$0xff]
  %v63 = vld [vmem:[%s2 + $0xd8] sm:$0xff]
  %v64 = vld [vmem:[%s2 + $0xe0] sm:$0xff]
  %v65 = vld [vmem:[%s2 + $0xe8] sm:$0xff]
  %v66 = vld [vmem:[%s2 + $0xf0] sm:$0xff]
  %v67 = vld [vmem:[%s2 + $0xf8] sm:$0xff]
  %v68 = vld [vmem:[%s2 + $0x100] sm:$0xff]
  %v69 = vld [vmem:[%s2 + $0x108] sm:$0xff]
  %v70 = vld [vmem:[%s2 + $0x110] sm:$0xff]
  %v71 = vld [vmem:[%s2 + $0x118] sm:$0xff]
  %v72 = vld [vmem:[%s2 + $0x120] sm:$0xff]
  %v73 = vld [vmem:[%s2 + $0x128] sm:$0xff]
  %v74 = vld [vmem:[%s2 + $0x130] sm:$0xff]
  %v75 = vld [vmem:[%s2 + $0x138] sm:$0xff]
  %v76 = vld [vmem:[%s2 + $0x140] sm:$0xff]
  %v77 = vld [vmem:[%s2 + $0x148] sm:$0xff]
  %v78 = vld [vmem:[%s2 + $0x150] sm:$0xff]
  %v79 = vld [vmem:[%s2 + $0x158] sm:$0xff]
  %v80 = vld [vmem:[%s2 + $0x160] sm:$0xff]
  %v81 = vld [vmem:[%s2 + $0x168] sm:$0xff]
  %v82 = vld [vmem:[%s2 + $0x170] sm:$0xff]
  %v83 = vld [vmem:[%s2 + $0x178] sm:$0xff]
  %v84 = vld [vmem:[%s2 + $0x180] sm:$0xff]
  %v85 = vld [vmem:[%s2 + $0x188] sm:$0xff]
  %v86 = vld [vmem:[%s2 + $0x190] sm:$0xff]
  %v87 = vld [vmem:[%s2 + $0x198] sm:$0xff]
  %v88 = vld [vmem:[%s2 + $0x1a0] sm:$0xff]
  %v89 = vld [vmem:[%s2 + $0x1a8] sm:$0xff]
  %v90 = vld [vmem:[%s2 + $0x1b0] sm:$0xff]
  %v91 = vld [vmem:[%s2 + $0x1b8] sm:$0xff]
  %v92 = vld [vmem:[%s2 + $0x1c0] sm:$0xff]
  %v93 = vld [vmem:[%s2 + $0x1c8] sm:$0xff]
  %v94 = vld [vmem:[%s2 + $0x1d0] sm:$0xff]
  %v95 = vld [vmem:[%s2 + $0x1d8] sm:$0xff]
  %v96 = vld [vmem:[%s2 + $0x1e0] sm:$0xff]
  %v97 = vld [vmem:[%s2 + $0x1e8] sm:$0xff]
  %v98 = vld [vmem:[%s2 + $0x1f0] sm:$0xff]
  %v99 = vld [vmem:[%s2 + $0x1f8] sm:$0xff]
  %v100 = vld [vmem:[%s2 + $0x200] sm:$0xff]
  %v101 = vld [vmem:[%s2 + $0x208] sm:$0xff]
  %v102 = vld [vmem:[%s2 + $0x210] sm:$0xff]
  %v103 = vld [vmem:[%s2 + $0x218] sm:$0xff]
  %v104 = vld [vmem:[%s2 + $0x220] sm:$0xff]
  %v105 = vld [vmem:[%s2 + $0x228] sm:$0xff]
  %v106 = vld [vmem:[%s2 + $0x230] sm:$0xff]
  %v107 = vld [vmem:[%s2 + $0x238] sm:$0xff]
  %v108 = vld [vmem:[%s2 + $0x240] sm:$0xff]
  %v109 = vld [vmem:[%s2 + $0x248] sm:$0xff]
  %v110 = vld [vmem:[%s2 + $0x250] sm:$0xff]
  %v111 = vld [vmem:[%s2 + $0x258] sm:$0xff]
  %v112 = vld [vmem:[%s2 + $0x260] sm:$0xff]
  %v113 = vld [vmem:[%s2 + $0x268] sm:$0xff]
  %v114 = vld [vmem:[%s2 + $0x270] sm:$0xff]
  %v115 = vld [vmem:[%s2 + $0x278] sm:$0xff]
  %v116 = vld [vmem:[%s2 + $0x280] sm:$0xff]
  %v117 = vld [vmem:[%s2 + $0x288] sm:$0xff]
  %v118 = vld [vmem:[%s2 + $0x290] sm:$0xff]
  %v119 = vld [vmem:[%s2 + $0x298] sm:$0xff]
  %v120 = vld [vmem:[%s2 + $0x2a0] sm:$0xff]
  %v121 = vld [vmem:[%s2 + $0x2a8] sm:$0xff]
  %v122 = vld [vmem:[%s2 + $0x2b0] sm:$0xff]
  %v123 = vld [vmem:[%s2 + $0x2b8] sm:$0xff]
  %v124 = vld [vmem:[%s2 + $0x2c0] sm:$0xff]
  %v125 = vld [vmem:[%s2 + $0x2c8] sm:$0xff]
  %v126 = vld [vmem:[%s2 + $0x2d0] sm:$0xff]
  %v127 = vld [vmem:[%s2 + $0x2d8] sm:$0xff]
  %v128 = vld [vmem:[%s2 + $0x2e0] sm:$0xff]
  %v129 = vld [vmem:[%s2 + $0x2e8] sm:$0xff]
  %v130 = vld [vmem:[%s2 + $0x2f0] sm:$0xff]
  %v131 = vld [vmem:[%s2 + $0x2f8] sm:$0xff]
  %v132 = vld [vmem:[%s2 + $0x300] sm:$0xff]
  %v133 = vld [vmem:[%s2 + $0x308] sm:$0xff]
  %v134 = vld [vmem:[%s2 + $0x310] sm:$0xff]
  %v135 = vld [vmem:[%s2 + $0x318] sm:$0xff]
  %v136 = vld [vmem:[%s2 + $0x320] sm:$0xff]
  %v137 = vld [vmem:[%s2 + $0x328] sm:$0xff]
  %v138 = vld [vmem:[%s2 + $0x330] sm:$0xff]
  %v139 = vld [vmem:[%s2 + $0x338] sm:$0xff]
  %v140 = vld [vmem:[%s2 + $0x340] sm:$0xff]
  %v141 = vld [vmem:[%s2 + $0x348] sm:$0xff]
  %v142 = vld [vmem:[%s2 + $0x350] sm:$0xff]
  %v143 = vld [vmem:[%s2 + $0x358] sm:$0xff]
  %v144 = vld [vmem:[%s2 + $0x360] sm:$0xff]
  %v145 = vld [vmem:[%s2 + $0x368] sm:$0xff]
  %v146 = vld [vmem:[%s2 + $0x370] sm:$0xff]
  %v147 = vld [vmem:[%s2 + $0x378] sm:$0xff]
  %v148 = vld [vmem:[%s2 + $0x380] sm:$0xff]
  %v149 = vld [vmem:[%s2 + $0x388] sm:$0xff]
  %v150 = vld [vmem:[%s2 + $0x390] sm:$0xff]
  %v151 = vld [vmem:[%s2 + $0x398] sm:$0xff]
  %v152 = vld [vmem:[%s2 + $0x3a0] sm:$0xff]
  %v153 = vld [vmem:[%s2 + $0x3a8] sm:$0xff]
  %v154 = vld [vmem:[%s2 + $0x3b0] sm:$0xff]
  %v155 = vld [vmem:[%s2 + $0x3b8] sm:$0xff]
  %v156 = vld [vmem:[%s2 + $0x3c0] sm:$0xff]
  %v157 = vld [vmem:[%s2 + $0x3c8] sm:$0xff]
  %v158 = vld [vmem:[%s2 + $0x3d0] sm:$0xff]
  %v159 = vld [vmem:[%s2 + $0x3d8] sm:$0xff]
  %v160 = vld [vmem:[%s2 + $0x3e0] sm:$0xff]
  %v161 = vld [vmem:[%s2 + $0x3e8] sm:$0xff]
  %v162 = vld [vmem:[%s2 + $0x3f0] sm:$0xff]
  %v163 = vld [vmem:[%s2 + $0x3f8] sm:$0xff]
  %v164 = vld [vmem:[%s2 + $0x400] sm:$0xff]
  %v165 = vld [vmem:[%s2 + $0x408] sm:$0xff]
  %v166 = vld [vmem:[%s2 + $0x410] sm:$0xff]
  %v167 = vld [vmem:[%s2 + $0x418] sm:$0xff]
  %v168 = vld [vmem:[%s2 + $0x420] sm:$0xff]
  %v169 = vld [vmem:[%s2 + $0x428] sm:$0xff]
  %v170 = vld [vmem:[%s2 + $0x430] sm:$0xff]
  %v171 = vld [vmem:[%s2 + $0x438] sm:$0xff]
  %v172 = vld [vmem:[%s2 + $0x440] sm:$0xff]
  %v173 = vld [vmem:[%s2 + $0x448] sm:$0xff]
  %v174 = vld [vmem:[%s2 + $0x450] sm:$0xff]
  %v175 = vld [vmem:[%s2 + $0x458] sm:$0xff]
  %v176 = vld [vmem:[%s2 + $0x460] sm:$0xff]
  %v177 = vld [vmem:[%s2 + $0x468] sm:$0xff]
  %v178 = vld [vmem:[%s2 + $0x470] sm:$0xff]
  %v179 = vld [vmem:[%s2 + $0x478] sm:$0xff]
  %v180 = vld [vmem:[%s2 + $0x480] sm:$0xff]
  %v181 = vld [vmem:[%s2 + $0x488] sm:$0xff]
  %v182 = vld [vmem:[%s2 + $0x490] sm:$0xff]
  %v183 = vld [vmem:[%s2 + $0x498] sm:$0xff]
  %v184 = vld [vmem:[%s2 + $0x4a0] sm:$0xff]
  %v185 = vld [vmem:[%s2 + $0x4a8] sm:$0xff]
  %v186 = vld [vmem:[%s2 + $0x4b0] sm:$0xff]
  %v187 = vld [vmem:[%s2 + $0x4b8] sm:$0xff]
  %v188 = vld [vmem:[%s2 + $0x4c0] sm:$0xff]
  %v189 = vld [vmem:[%s2 + $0x4c8] sm:$0xff]
  %v190 = vld [vmem:[%s2 + $0x4d0] sm:$0xff]
  %v191 = vld [vmem:[%s2 + $0x4d8] sm:$0xff]
  %v192 = vld [vmem:[%s2 + $0x4e0] sm:$0xff]
  %v193 = vld [vmem:[%s2 + $0x4e8] sm:$0xff]
  %v194 = vld [vmem:[%s2 + $0x4f0] sm:$0xff]
  %v195 = vld [vmem:[%s2 + $0x4f8] sm:$0xff]
  %v196 = vld [vmem:[%s2 + $0x500] sm:$0xff]
  %v197 = vld [vmem:[%s2 + $0x508] sm:$0xff]
  %v198 = vld [vmem:[%s2 + $0x510] sm:$0xff]
  %v199 = vld [vmem:[%s2 + $0x518] sm:$0xff]
  %v200 = vld [vmem:[%s2 + $0x520] sm:$0xff]
  %v201 = vld [vmem:[%s2 + $0x528] sm:$0xff]
  %v202 = vld [vmem:[%s2 + $0x530] sm:$0xff]
  %v203 = vld [vmem:[%s2 + $0x538] sm:$0xff]
  %v204 = vld [vmem:[%s2 + $0x540] sm:$0xff]
  %v205 = vld [vmem:[%s2 + $0x548] sm:$0xff]
  %v206 = vld [vmem:[%s2 + $0x550] sm:$0xff]
  %v207 = vld [vmem:[%s2 + $0x558] sm:$0xff]
  %v208 = vld [vmem:[%s2 + $0x560] sm:$0xff]
  %v209 = vld [vmem:[%s2 + $0x568] sm:$0xff]
  %v210 = vld [vmem:[%s2 + $0x570] sm:$0xff]
  %v211 = vld [vmem:[%s2 + $0x578] sm:$0xff]
  %v212 = vld [vmem:[%s2 + $0x580] sm:$0xff]
  %v213 = vld [vmem:[%s2 + $0x588] sm:$0xff]
  %v214 = vld [vmem:[%s2 + $0x590] sm:$0xff]
  %v215 = vld [vmem:[%s2 + $0x598] sm:$0xff]
  %v216 = vld [vmem:[%s2 + $0x5a0] sm:$0xff]
  %v217 = vld [vmem:[%s2 + $0x5a8] sm:$0xff]
  %v218 = vld [vmem:[%s2 + $0x5b0] sm:$0xff]
  %v219 = vld [vmem:[%s2 + $0x5b8] sm:$0xff]
  %v220 = vld [vmem:[%s2 + $0x5c0] sm:$0xff]
  %v221 = vld [vmem:[%s2 + $0x5c8] sm:$0xff]
  %v222 = vld [vmem:[%s2 + $0x5d0] sm:$0xff]
  %v223 = vld [vmem:[%s2 + $0x5d8] sm:$0xff]
  %v224 = vld [vmem:[%s2 + $0x5e0] sm:$0xff]
  %v225 = vld [vmem:[%s2 + $0x5e8] sm:$0xff]
  %v226 = vld [vmem:[%s2 + $0x5f0] sm:$0xff]
  %v227 = vld [vmem:[%s2 + $0x5f8] sm:$0xff]
  %v228 = vld [vmem:[%s3] sm:$0xf]
  %v230 = vlaneseq
  %v231 = vshrl.u32 %v230, 7
  %v232 = vsub.s32 0, %v231
  %v233 = vrot.slane %v228, %v232
  %v234 = vlaneseq
  %v235 = vshrl.u32 %v234, 7
  %v236 = vsub.s32 1, %v235
  %v237 = vrot.slane %v228, %v236
  %v238 = vlaneseq
  %v239 = vshrl.u32 %v238, 7
  %v240 = vsub.s32 2, %v239
  %v241 = vrot.slane %v228, %v240
  %v242 = vlaneseq
  %v243 = vshrl.u32 %v242, 7
  %v244 = vsub.s32 3, %v243
  %v245 = vrot.slane %v228, %v244
  %v256 = vunpack.c.l.b16 %v30
  %v257 = vunpack.c.h.b16 %v30
  %v258 = vunpack.c.l.b16 %v31
  %v259 = vunpack.c.h.b16 %v31
  %v260 = vunpack.c.l.b16 %v32
  %v261 = vunpack.c.h.b16 %v32
  %v262 = vunpack.c.l.b16 %v33
  %v263 = vunpack.c.h.b16 %v33
  %v264 = vunpack.c.l.b16 %v34
  %v265 = vunpack.c.h.b16 %v34
  %v266 = vunpack.c.l.b16 %v35
  %v267 = vunpack.c.h.b16 %v35
  %v268 = vpack.c.b16 %v262, %v256
  %v269 = vpack.c.b16 %v263, %v257
  %v270 = vpack.c.b16 %v264, %v258
  %v271 = vpack.c.b16 %v265, %v259
  %v272 = vpack.c.b16 %v266, %v260
  %v273 = vpack.c.b16 %v267, %v261
  %v472 = vunpack.c.l.b16 %v36
  %v473 = vunpack.c.h.b16 %v36
  %v474 = vunpack.c.l.b16 %v37
  %v475 = vunpack.c.h.b16 %v37
  %v476 = vunpack.c.l.b16 %v38
  %v477 = vunpack.c.h.b16 %v38
  %v478 = vunpack.c.l.b16 %v39
  %v479 = vunpack.c.h.b16 %v39
  %v480 = vunpack.c.l.b16 %v40
  %v481 = vunpack.c.h.b16 %v40
  %v482 = vunpack.c.l.b16 %v41
  %v483 = vunpack.c.h.b16 %v41
  %v484 = vunpack.c.l.b16 %v42
  %v485 = vunpack.c.h.b16 %v42
  %v486 = vunpack.c.l.b16 %v43
  %v487 = vunpack.c.h.b16 %v43
  %v488 = vunpack.c.l.b16 %v44
  %v489 = vunpack.c.h.b16 %v44
  %v490 = vunpack.c.l.b16 %v45
  %v491 = vunpack.c.h.b16 %v45
  %v492 = vunpack.c.l.b16 %v46
  %v493 = vunpack.c.h.b16 %v46
  %v494 = vunpack.c.l.b16 %v47
  %v495 = vunpack.c.h.b16 %v47
  %v496 = vunpack.c.l.b16 %v48
  %v497 = vunpack.c.h.b16 %v48
  %v498 = vunpack.c.l.b16 %v49
  %v499 = vunpack.c.h.b16 %v49
  %v500 = vunpack.c.l.b16 %v50
  %v501 = vunpack.c.h.b16 %v50
  %v502 = vunpack.c.l.b16 %v51
  %v503 = vunpack.c.h.b16 %v51
  %v504 = vunpack.c.l.b16 %v52
  %v505 = vunpack.c.h.b16 %v52
  %v506 = vunpack.c.l.b16 %v53
  %v507 = vunpack.c.h.b16 %v53
  %v508 = vunpack.c.l.b16 %v54
  %v509 = vunpack.c.h.b16 %v54
  %v510 = vunpack.c.l.b16 %v55
  %v511 = vunpack.c.h.b16 %v55
  %v512 = vunpack.c.l.b16 %v56
  %v513 = vunpack.c.h.b16 %v56
  %v514 = vunpack.c.l.b16 %v57
  %v515 = vunpack.c.h.b16 %v57
  %v516 = vunpack.c.l.b16 %v58
  %v517 = vunpack.c.h.b16 %v58
  %v518 = vunpack.c.l.b16 %v59
  %v519 = vunpack.c.h.b16 %v59
  %v520 = vunpack.c.l.b16 %v60
  %v521 = vunpack.c.h.b16 %v60
  %v522 = vunpack.c.l.b16 %v61
  %v523 = vunpack.c.h.b16 %v61
  %v524 = vunpack.c.l.b16 %v62
  %v525 = vunpack.c.h.b16 %v62
  %v526 = vunpack.c.l.b16 %v63
  %v527 = vunpack.c.h.b16 %v63
  %v528 = vunpack.c.l.b16 %v64
  %v529 = vunpack.c.h.b16 %v64
  %v530 = vunpack.c.l.b16 %v65
  %v531 = vunpack.c.h.b16 %v65
  %v532 = vunpack.c.l.b16 %v66
  %v533 = vunpack.c.h.b16 %v66
  %v534 = vunpack.c.l.b16 %v67
  %v535 = vunpack.c.h.b16 %v67
  %v536 = vunpack.c.l.b16 %v68
  %v537 = vunpack.c.h.b16 %v68
  %v538 = vunpack.c.l.b16 %v69
  %v539 = vunpack.c.h.b16 %v69
  %v540 = vunpack.c.l.b16 %v70
  %v541 = vunpack.c.h.b16 %v70
  %v542 = vunpack.c.l.b16 %v71
  %v543 = vunpack.c.h.b16 %v71
  %v544 = vunpack.c.l.b16 %v72
  %v545 = vunpack.c.h.b16 %v72
  %v546 = vunpack.c.l.b16 %v73
  %v547 = vunpack.c.h.b16 %v73
  %v548 = vunpack.c.l.b16 %v74
  %v549 = vunpack.c.h.b16 %v74
  %v550 = vunpack.c.l.b16 %v75
  %v551 = vunpack.c.h.b16 %v75
  %v552 = vunpack.c.l.b16 %v76
  %v553 = vunpack.c.h.b16 %v76
  %v554 = vunpack.c.l.b16 %v77
  %v555 = vunpack.c.h.b16 %v77
  %v556 = vunpack.c.l.b16 %v78
  %v557 = vunpack.c.h.b16 %v78
  %v558 = vunpack.c.l.b16 %v79
  %v559 = vunpack.c.h.b16 %v79
  %v560 = vunpack.c.l.b16 %v80
  %v561 = vunpack.c.h.b16 %v80
  %v562 = vunpack.c.l.b16 %v81
  %v563 = vunpack.c.h.b16 %v81
  %v564 = vunpack.c.l.b16 %v82
  %v565 = vunpack.c.h.b16 %v82
  %v566 = vunpack.c.l.b16 %v83
  %v567 = vunpack.c.h.b16 %v83
  %v568 = vunpack.c.l.b16 %v84
  %v569 = vunpack.c.h.b16 %v84
  %v570 = vunpack.c.l.b16 %v85
  %v571 = vunpack.c.h.b16 %v85
  %v572 = vunpack.c.l.b16 %v86
  %v573 = vunpack.c.h.b16 %v86
  %v574 = vunpack.c.l.b16 %v87
  %v575 = vunpack.c.h.b16 %v87
  %v576 = vunpack.c.l.b16 %v88
  %v577 = vunpack.c.h.b16 %v88
  %v578 = vunpack.c.l.b16 %v89
  %v579 = vunpack.c.h.b16 %v89
  %v580 = vunpack.c.l.b16 %v90
  %v581 = vunpack.c.h.b16 %v90
  %v582 = vunpack.c.l.b16 %v91
  %v583 = vunpack.c.h.b16 %v91
  %v584 = vunpack.c.l.b16 %v92
  %v585 = vunpack.c.h.b16 %v92
  %v586 = vunpack.c.l.b16 %v93
  %v587 = vunpack.c.h.b16 %v93
  %v588 = vunpack.c.l.b16 %v94
  %v589 = vunpack.c.h.b16 %v94
  %v590 = vunpack.c.l.b16 %v95
  %v591 = vunpack.c.h.b16 %v95
  %v592 = vunpack.c.l.b16 %v96
  %v593 = vunpack.c.h.b16 %v96
  %v594 = vunpack.c.l.b16 %v97
  %v595 = vunpack.c.h.b16 %v97
  %v596 = vunpack.c.l.b16 %v98
  %v597 = vunpack.c.h.b16 %v98
  %v598 = vunpack.c.l.b16 %v99
  %v599 = vunpack.c.h.b16 %v99
  %v600 = vunpack.c.l.b16 %v100
  %v601 = vunpack.c.h.b16 %v100
  %v602 = vunpack.c.l.b16 %v101
  %v603 = vunpack.c.h.b16 %v101
  %v604 = vunpack.c.l.b16 %v102
  %v605 = vunpack.c.h.b16 %v102
  %v606 = vunpack.c.l.b16 %v103
  %v607 = vunpack.c.h.b16 %v103
  %v608 = vunpack.c.l.b16 %v104
  %v609 = vunpack.c.h.b16 %v104
  %v610 = vunpack.c.l.b16 %v105
  %v611 = vunpack.c.h.b16 %v105
  %v612 = vunpack.c.l.b16 %v106
  %v613 = vunpack.c.h.b16 %v106
  %v614 = vunpack.c.l.b16 %v107
  %v615 = vunpack.c.h.b16 %v107
  %v616 = vunpack.c.l.b16 %v108
  %v617 = vunpack.c.h.b16 %v108
  %v618 = vunpack.c.l.b16 %v109
  %v619 = vunpack.c.h.b16 %v109
  %v620 = vunpack.c.l.b16 %v110
  %v621 = vunpack.c.h.b16 %v110
  %v622 = vunpack.c.l.b16 %v111
  %v623 = vunpack.c.h.b16 %v111
  %v624 = vunpack.c.l.b16 %v112
  %v625 = vunpack.c.h.b16 %v112
  %v626 = vunpack.c.l.b16 %v113
  %v627 = vunpack.c.h.b16 %v113
  %v628 = vunpack.c.l.b16 %v114
  %v629 = vunpack.c.h.b16 %v114
  %v630 = vunpack.c.l.b16 %v115
  %v631 = vunpack.c.h.b16 %v115
  %v632 = vunpack.c.l.b16 %v116
  %v633 = vunpack.c.h.b16 %v116
  %v634 = vunpack.c.l.b16 %v117
  %v635 = vunpack.c.h.b16 %v117
  %v636 = vunpack.c.l.b16 %v118
  %v637 = vunpack.c.h.b16 %v118
  %v638 = vunpack.c.l.b16 %v119
  %v639 = vunpack.c.h.b16 %v119
  %v640 = vunpack.c.l.b16 %v120
  %v641 = vunpack.c.h.b16 %v120
  %v642 = vunpack.c.l.b16 %v121
  %v643 = vunpack.c.h.b16 %v121
  %v644 = vunpack.c.l.b16 %v122
  %v645 = vunpack.c.h.b16 %v122
  %v646 = vunpack.c.l.b16 %v123
  %v647 = vunpack.c.h.b16 %v123
  %v648 = vunpack.c.l.b16 %v124
  %v649 = vunpack.c.h.b16 %v124
  %v650 = vunpack.c.l.b16 %v125
  %v651 = vunpack.c.h.b16 %v125
  %v652 = vunpack.c.l.b16 %v126
  %v653 = vunpack.c.h.b16 %v126
  %v654 = vunpack.c.l.b16 %v127
  %v655 = vunpack.c.h.b16 %v127
  %v656 = vunpack.c.l.b16 %v128
  %v657 = vunpack.c.h.b16 %v128
  %v658 = vunpack.c.l.b16 %v129
  %v659 = vunpack.c.h.b16 %v129
  %v660 = vunpack.c.l.b16 %v130
  %v661 = vunpack.c.h.b16 %v130
  %v662 = vunpack.c.l.b16 %v131
  %v663 = vunpack.c.h.b16 %v131
  %v664 = vunpack.c.l.b16 %v132
  %v665 = vunpack.c.h.b16 %v132
  %v666 = vunpack.c.l.b16 %v133
  %v667 = vunpack.c.h.b16 %v133
  %v668 = vunpack.c.l.b16 %v134
  %v669 = vunpack.c.h.b16 %v134
  %v670 = vunpack.c.l.b16 %v135
  %v671 = vunpack.c.h.b16 %v135
  %v672 = vunpack.c.l.b16 %v136
  %v673 = vunpack.c.h.b16 %v136
  %v674 = vunpack.c.l.b16 %v137
  %v675 = vunpack.c.h.b16 %v137
  %v676 = vunpack.c.l.b16 %v138
  %v677 = vunpack.c.h.b16 %v138
  %v678 = vunpack.c.l.b16 %v139
  %v679 = vunpack.c.h.b16 %v139
  %v680 = vunpack.c.l.b16 %v140
  %v681 = vunpack.c.h.b16 %v140
  %v682 = vunpack.c.l.b16 %v141
  %v683 = vunpack.c.h.b16 %v141
  %v684 = vunpack.c.l.b16 %v142
  %v685 = vunpack.c.h.b16 %v142
  %v686 = vunpack.c.l.b16 %v143
  %v687 = vunpack.c.h.b16 %v143
  %v688 = vunpack.c.l.b16 %v144
  %v689 = vunpack.c.h.b16 %v144
  %v690 = vunpack.c.l.b16 %v145
  %v691 = vunpack.c.h.b16 %v145
  %v692 = vunpack.c.l.b16 %v146
  %v693 = vunpack.c.h.b16 %v146
  %v694 = vunpack.c.l.b16 %v147
  %v695 = vunpack.c.h.b16 %v147
  %v696 = vunpack.c.l.b16 %v148
  %v697 = vunpack.c.h.b16 %v148
  %v698 = vunpack.c.l.b16 %v149
  %v699 = vunpack.c.h.b16 %v149
  %v700 = vunpack.c.l.b16 %v150
  %v701 = vunpack.c.h.b16 %v150
  %v702 = vunpack.c.l.b16 %v151
  %v703 = vunpack.c.h.b16 %v151
  %v704 = vunpack.c.l.b16 %v152
  %v705 = vunpack.c.h.b16 %v152
  %v706 = vunpack.c.l.b16 %v153
  %v707 = vunpack.c.h.b16 %v153
  %v708 = vunpack.c.l.b16 %v154
  %v709 = vunpack.c.h.b16 %v154
  %v710 = vunpack.c.l.b16 %v155
  %v711 = vunpack.c.h.b16 %v155
  %v712 = vunpack.c.l.b16 %v156
  %v713 = vunpack.c.h.b16 %v156
  %v714 = vunpack.c.l.b16 %v157
  %v715 = vunpack.c.h.b16 %v157
  %v716 = vunpack.c.l.b16 %v158
  %v717 = vunpack.c.h.b16 %v158
  %v718 = vunpack.c.l.b16 %v159
  %v719 = vunpack.c.h.b16 %v159
  %v720 = vunpack.c.l.b16 %v160
  %v721 = vunpack.c.h.b16 %v160
  %v722 = vunpack.c.l.b16 %v161
  %v723 = vunpack.c.h.b16 %v161
  %v724 = vunpack.c.l.b16 %v162
  %v725 = vunpack.c.h.b16 %v162
  %v726 = vunpack.c.l.b16 %v163
  %v727 = vunpack.c.h.b16 %v163
  %v728 = vunpack.c.l.b16 %v164
  %v729 = vunpack.c.h.b16 %v164
  %v730 = vunpack.c.l.b16 %v165
  %v731 = vunpack.c.h.b16 %v165
  %v732 = vunpack.c.l.b16 %v166
  %v733 = vunpack.c.h.b16 %v166
  %v734 = vunpack.c.l.b16 %v167
  %v735 = vunpack.c.h.b16 %v167
  %v736 = vunpack.c.l.b16 %v168
  %v737 = vunpack.c.h.b16 %v168
  %v738 = vunpack.c.l.b16 %v169
  %v739 = vunpack.c.h.b16 %v169
  %v740 = vunpack.c.l.b16 %v170
  %v741 = vunpack.c.h.b16 %v170
  %v742 = vunpack.c.l.b16 %v171
  %v743 = vunpack.c.h.b16 %v171
  %v744 = vunpack.c.l.b16 %v172
  %v745 = vunpack.c.h.b16 %v172
  %v746 = vunpack.c.l.b16 %v173
  %v747 = vunpack.c.h.b16 %v173
  %v748 = vunpack.c.l.b16 %v174
  %v749 = vunpack.c.h.b16 %v174
  %v750 = vunpack.c.l.b16 %v175
  %v751 = vunpack.c.h.b16 %v175
  %v752 = vunpack.c.l.b16 %v176
  %v753 = vunpack.c.h.b16 %v176
  %v754 = vunpack.c.l.b16 %v177
  %v755 = vunpack.c.h.b16 %v177
  %v756 = vunpack.c.l.b16 %v178
  %v757 = vunpack.c.h.b16 %v178
  %v758 = vunpack.c.l.b16 %v179
  %v759 = vunpack.c.h.b16 %v179
  %v760 = vunpack.c.l.b16 %v180
  %v761 = vunpack.c.h.b16 %v180
  %v762 = vunpack.c.l.b16 %v181
  %v763 = vunpack.c.h.b16 %v181
  %v764 = vunpack.c.l.b16 %v182
  %v765 = vunpack.c.h.b16 %v182
  %v766 = vunpack.c.l.b16 %v183
  %v767 = vunpack.c.h.b16 %v183
  %v768 = vunpack.c.l.b16 %v184
  %v769 = vunpack.c.h.b16 %v184
  %v770 = vunpack.c.l.b16 %v185
  %v771 = vunpack.c.h.b16 %v185
  %v772 = vunpack.c.l.b16 %v186
  %v773 = vunpack.c.h.b16 %v186
  %v774 = vunpack.c.l.b16 %v187
  %v775 = vunpack.c.h.b16 %v187
  %v776 = vunpack.c.l.b16 %v188
  %v777 = vunpack.c.h.b16 %v188
  %v778 = vunpack.c.l.b16 %v189
  %v779 = vunpack.c.h.b16 %v189
  %v780 = vunpack.c.l.b16 %v190
  %v781 = vunpack.c.h.b16 %v190
  %v782 = vunpack.c.l.b16 %v191
  %v783 = vunpack.c.h.b16 %v191
  %v784 = vunpack.c.l.b16 %v192
  %v785 = vunpack.c.h.b16 %v192
  %v786 = vunpack.c.l.b16 %v193
  %v787 = vunpack.c.h.b16 %v193
  %v788 = vunpack.c.l.b16 %v194
  %v789 = vunpack.c.h.b16 %v194
  %v790 = vunpack.c.l.b16 %v195
  %v791 = vunpack.c.h.b16 %v195
  %v792 = vunpack.c.l.b16 %v196
  %v793 = vunpack.c.h.b16 %v196
  %v794 = vunpack.c.l.b16 %v197
  %v795 = vunpack.c.h.b16 %v197
  %v796 = vunpack.c.l.b16 %v198
  %v797 = vunpack.c.h.b16 %v198
  %v798 = vunpack.c.l.b16 %v199
  %v799 = vunpack.c.h.b16 %v199
  %v800 = vunpack.c.l.b16 %v200
  %v801 = vunpack.c.h.b16 %v200
  %v802 = vunpack.c.l.b16 %v201
  %v803 = vunpack.c.h.b16 %v201
  %v804 = vunpack.c.l.b16 %v202
  %v805 = vunpack.c.h.b16 %v202
  %v806 = vunpack.c.l.b16 %v203
  %v807 = vunpack.c.h.b16 %v203
  %v808 = vunpack.c.l.b16 %v204
  %v809 = vunpack.c.h.b16 %v204
  %v810 = vunpack.c.l.b16 %v205
  %v811 = vunpack.c.h.b16 %v205
  %v812 = vunpack.c.l.b16 %v206
  %v813 = vunpack.c.h.b16 %v206
  %v814 = vunpack.c.l.b16 %v207
  %v815 = vunpack.c.h.b16 %v207
  %v816 = vunpack.c.l.b16 %v208
  %v817 = vunpack.c.h.b16 %v208
  %v818 = vunpack.c.l.b16 %v209
  %v819 = vunpack.c.h.b16 %v209
  %v820 = vunpack.c.l.b16 %v210
  %v821 = vunpack.c.h.b16 %v210
  %v822 = vunpack.c.l.b16 %v211
  %v823 = vunpack.c.h.b16 %v211
  %v824 = vunpack.c.l.b16 %v212
  %v825 = vunpack.c.h.b16 %v212
  %v826 = vunpack.c.l.b16 %v213
  %v827 = vunpack.c.h.b16 %v213
  %v828 = vunpack.c.l.b16 %v214
  %v829 = vunpack.c.h.b16 %v214
  %v830 = vunpack.c.l.b16 %v215
  %v831 = vunpack.c.h.b16 %v215
  %v832 = vunpack.c.l.b16 %v216
  %v833 = vunpack.c.h.b16 %v216
  %v834 = vunpack.c.l.b16 %v217
  %v835 = vunpack.c.h.b16 %v217
  %v836 = vunpack.c.l.b16 %v218
  %v837 = vunpack.c.h.b16 %v218
  %v838 = vunpack.c.l.b16 %v219
  %v839 = vunpack.c.h.b16 %v219
  %v840 = vunpack.c.l.b16 %v220
  %v841 = vunpack.c.h.b16 %v220
  %v842 = vunpack.c.l.b16 %v221
  %v843 = vunpack.c.h.b16 %v221
  %v844 = vunpack.c.l.b16 %v222
  %v845 = vunpack.c.h.b16 %v222
  %v846 = vunpack.c.l.b16 %v223
  %v847 = vunpack.c.h.b16 %v223
  %v848 = vunpack.c.l.b16 %v224
  %v849 = vunpack.c.h.b16 %v224
  %v850 = vunpack.c.l.b16 %v225
  %v851 = vunpack.c.h.b16 %v225
  %v852 = vunpack.c.l.b16 %v226
  %v853 = vunpack.c.h.b16 %v226
  %v854 = vunpack.c.l.b16 %v227
  %v855 = vunpack.c.h.b16 %v227
  %v856 = vpack.c.b16 %v476, %v472
  %v857 = vpack.c.b16 %v477, %v473
  %v858 = vpack.c.b16 %v478, %v474
  %v859 = vpack.c.b16 %v479, %v475
  %v860 = vpack.c.b16 %v484, %v480
  %v861 = vpack.c.b16 %v485, %v481
  %v862 = vpack.c.b16 %v486, %v482
  %v863 = vpack.c.b16 %v487, %v483
  %v864 = vpack.c.b16 %v492, %v488
  %v865 = vpack.c.b16 %v493, %v489
  %v866 = vpack.c.b16 %v494, %v490
  %v867 = vpack.c.b16 %v495, %v491
  %v868 = vpack.c.b16 %v500, %v496
  %v869 = vpack.c.b16 %v501, %v497
  %v870 = vpack.c.b16 %v502, %v498
  %v871 = vpack.c.b16 %v503, %v499
  %v872 = vpack.c.b16 %v508, %v504
  %v873 = vpack.c.b16 %v509, %v505
  %v874 = vpack.c.b16 %v510, %v506
  %v875 = vpack.c.b16 %v511, %v507
  %v876 = vpack.c.b16 %v516, %v512
  %v877 = vpack.c.b16 %v517, %v513
  %v878 = vpack.c.b16 %v518, %v514
  %v879 = vpack.c.b16 %v519, %v515
  %v880 = vpack.c.b16 %v524, %v520
  %v881 = vpack.c.b16 %v525, %v521
  %v882 = vpack.c.b16 %v526, %v522
  %v883 = vpack.c.b16 %v527, %v523
  %v884 = vpack.c.b16 %v532, %v528
  %v885 = vpack.c.b16 %v533, %v529
  %v886 = vpack.c.b16 %v534, %v530
  %v887 = vpack.c.b16 %v535, %v531
  %v888 = vpack.c.b16 %v540, %v536
  %v889 = vpack.c.b16 %v541, %v537
  %v890 = vpack.c.b16 %v542, %v538
  %v891 = vpack.c.b16 %v543, %v539
  %v892 = vpack.c.b16 %v548, %v544
  %v893 = vpack.c.b16 %v549, %v545
  %v894 = vpack.c.b16 %v550, %v546
  %v895 = vpack.c.b16 %v551, %v547
  %v896 = vpack.c.b16 %v556, %v552
  %v897 = vpack.c.b16 %v557, %v553
  %v898 = vpack.c.b16 %v558, %v554
  %v899 = vpack.c.b16 %v559, %v555
  %v900 = vpack.c.b16 %v564, %v560
  %v901 = vpack.c.b16 %v565, %v561
  %v902 = vpack.c.b16 %v566, %v562
  %v903 = vpack.c.b16 %v567, %v563
  %v904 = vpack.c.b16 %v572, %v568
  %v905 = vpack.c.b16 %v573, %v569
  %v906 = vpack.c.b16 %v574, %v570
  %v907 = vpack.c.b16 %v575, %v571
  %v908 = vpack.c.b16 %v580, %v576
  %v909 = vpack.c.b16 %v581, %v577
  %v910 = vpack.c.b16 %v582, %v578
  %v911 = vpack.c.b16 %v583, %v579
  %v912 = vpack.c.b16 %v588, %v584
  %v913 = vpack.c.b16 %v589, %v585
  %v914 = vpack.c.b16 %v590, %v586
  %v915 = vpack.c.b16 %v591, %v587
  %v916 = vpack.c.b16 %v596, %v592
  %v917 = vpack.c.b16 %v597, %v593
  %v918 = vpack.c.b16 %v598, %v594
  %v919 = vpack.c.b16 %v599, %v595
  %v920 = vpack.c.b16 %v604, %v600
  %v921 = vpack.c.b16 %v605, %v601
  %v922 = vpack.c.b16 %v606, %v602
  %v923 = vpack.c.b16 %v607, %v603
  %v924 = vpack.c.b16 %v612, %v608
  %v925 = vpack.c.b16 %v613, %v609
  %v926 = vpack.c.b16 %v614, %v610
  %v927 = vpack.c.b16 %v615, %v611
  %v928 = vpack.c.b16 %v620, %v616
  %v929 = vpack.c.b16 %v621, %v617
  %v930 = vpack.c.b16 %v622, %v618
  %v931 = vpack.c.b16 %v623, %v619
  %v932 = vpack.c.b16 %v628, %v624
  %v933 = vpack.c.b16 %v629, %v625
  %v934 = vpack.c.b16 %v630, %v626
  %v935 = vpack.c.b16 %v631, %v627
  %v936 = vpack.c.b16 %v636, %v632
  %v937 = vpack.c.b16 %v637, %v633
  %v938 = vpack.c.b16 %v638, %v634
  %v939 = vpack.c.b16 %v639, %v635
  %v940 = vpack.c.b16 %v644, %v640
  %v941 = vpack.c.b16 %v645, %v641
  %v942 = vpack.c.b16 %v646, %v642
  %v943 = vpack.c.b16 %v647, %v643
  %v944 = vpack.c.b16 %v652, %v648
  %v945 = vpack.c.b16 %v653, %v649
  %v946 = vpack.c.b16 %v654, %v650
  %v947 = vpack.c.b16 %v655, %v651
  %v948 = vpack.c.b16 %v660, %v656
  %v949 = vpack.c.b16 %v661, %v657
  %v950 = vpack.c.b16 %v662, %v658
  %v951 = vpack.c.b16 %v663, %v659
  %v952 = vpack.c.b16 %v668, %v664
  %v953 = vpack.c.b16 %v669, %v665
  %v954 = vpack.c.b16 %v670, %v666
  %v955 = vpack.c.b16 %v671, %v667
  %v956 = vpack.c.b16 %v676, %v672
  %v957 = vpack.c.b16 %v677, %v673
  %v958 = vpack.c.b16 %v678, %v674
  %v959 = vpack.c.b16 %v679, %v675
  %v960 = vpack.c.b16 %v684, %v680
  %v961 = vpack.c.b16 %v685, %v681
  %v962 = vpack.c.b16 %v686, %v682
  %v963 = vpack.c.b16 %v687, %v683
  %v964 = vpack.c.b16 %v692, %v688
  %v965 = vpack.c.b16 %v693, %v689
  %v966 = vpack.c.b16 %v694, %v690
  %v967 = vpack.c.b16 %v695, %v691
  %v968 = vpack.c.b16 %v700, %v696
  %v969 = vpack.c.b16 %v701, %v697
  %v970 = vpack.c.b16 %v702, %v698
  %v971 = vpack.c.b16 %v703, %v699
  %v972 = vpack.c.b16 %v708, %v704
  %v973 = vpack.c.b16 %v709, %v705
  %v974 = vpack.c.b16 %v710, %v706
  %v975 = vpack.c.b16 %v711, %v707
  %v976 = vpack.c.b16 %v716, %v712
  %v977 = vpack.c.b16 %v717, %v713
  %v978 = vpack.c.b16 %v718, %v714
  %v979 = vpack.c.b16 %v719, %v715
  %v980 = vpack.c.b16 %v724, %v720
  %v981 = vpack.c.b16 %v725, %v721
  %v982 = vpack.c.b16 %v726, %v722
  %v983 = vpack.c.b16 %v727, %v723
  %v984 = vpack.c.b16 %v732, %v728
  %v985 = vpack.c.b16 %v733, %v729
  %v986 = vpack.c.b16 %v734, %v730
  %v987 = vpack.c.b16 %v735, %v731
  %v988 = vpack.c.b16 %v740, %v736
  %v989 = vpack.c.b16 %v741, %v737
  %v990 = vpack.c.b16 %v742, %v738
  %v991 = vpack.c.b16 %v743, %v739
  %v992 = vpack.c.b16 %v748, %v744
  %v993 = vpack.c.b16 %v749, %v745
  %v994 = vpack.c.b16 %v750, %v746
  %v995 = vpack.c.b16 %v751, %v747
  %v996 = vpack.c.b16 %v756, %v752
  %v997 = vpack.c.b16 %v757, %v753
  %v998 = vpack.c.b16 %v758, %v754
  %v999 = vpack.c.b16 %v759, %v755
  %v1000 = vpack.c.b16 %v764, %v760
  %v1001 = vpack.c.b16 %v765, %v761
  %v1002 = vpack.c.b16 %v766, %v762
  %v1003 = vpack.c.b16 %v767, %v763
  %v1004 = vpack.c.b16 %v772, %v768
  %v1005 = vpack.c.b16 %v773, %v769
  %v1006 = vpack.c.b16 %v774, %v770
  %v1007 = vpack.c.b16 %v775, %v771
  %v1008 = vpack.c.b16 %v780, %v776
  %v1009 = vpack.c.b16 %v781, %v777
  %v1010 = vpack.c.b16 %v782, %v778
  %v1011 = vpack.c.b16 %v783, %v779
  %v1012 = vpack.c.b16 %v788, %v784
  %v1013 = vpack.c.b16 %v789, %v785
  %v1014 = vpack.c.b16 %v790, %v786
  %v1015 = vpack.c.b16 %v791, %v787
  %v1016 = vpack.c.b16 %v796, %v792
  %v1017 = vpack.c.b16 %v797, %v793
  %v1018 = vpack.c.b16 %v798, %v794
  %v1019 = vpack.c.b16 %v799, %v795
  %v1020 = vpack.c.b16 %v804, %v800
  %v1021 = vpack.c.b16 %v805, %v801
  %v1022 = vpack.c.b16 %v806, %v802
  %v1023 = vpack.c.b16 %v807, %v803
  %v1024 = vpack.c.b16 %v812, %v808
  %v1025 = vpack.c.b16 %v813, %v809
  %v1026 = vpack.c.b16 %v814, %v810
  %v1027 = vpack.c.b16 %v815, %v811
  %v1028 = vpack.c.b16 %v820, %v816
  %v1029 = vpack.c.b16 %v821, %v817
  %v1030 = vpack.c.b16 %v822, %v818
  %v1031 = vpack.c.b16 %v823, %v819
  %v1032 = vpack.c.b16 %v828, %v824
  %v1033 = vpack.c.b16 %v829, %v825
  %v1034 = vpack.c.b16 %v830, %v826
  %v1035 = vpack.c.b16 %v831, %v827
  %v1036 = vpack.c.b16 %v836, %v832
  %v1037 = vpack.c.b16 %v837, %v833
  %v1038 = vpack.c.b16 %v838, %v834
  %v1039 = vpack.c.b16 %v839, %v835
  %v1040 = vpack.c.b16 %v844, %v840
  %v1041 = vpack.c.b16 %v845, %v841
  %v1042 = vpack.c.b16 %v846, %v842
  %v1043 = vpack.c.b16 %v847, %v843
  %v1044 = vpack.c.b16 %v852, %v848
  %v1045 = vpack.c.b16 %v853, %v849
  %v1046 = vpack.c.b16 %v854, %v850
  %v1047 = vpack.c.b16 %v855, %v851
  %1240 = vmatprep.subr.bf16.mxu0 %v885
  %1241 = vmatpush1.bf16.msra.mxu0 %v884
  %1242 = vmatprep.subr.bf16.mxu0 %v881
  %1243 = vmatpush1.bf16.msra.mxu0 %v880
  %1244 = vmatprep.subr.bf16.mxu0 %v877
  %1245 = vmatpush1.bf16.msra.mxu0 %v876
  %1246 = vmatprep.subr.bf16.mxu0 %v873
  %1247 = vmatpush1.bf16.msra.mxu0 %v872
  %1248 = vmatprep.subr.bf16.mxu0 %v869
  %1249 = vmatpush1.bf16.msra.mxu0 %v868
  %1250 = vmatprep.subr.bf16.mxu0 %v865
  %1251 = vmatpush1.bf16.msra.mxu0 %v864
  %1252 = vmatprep.subr.bf16.mxu0 %v861
  %1253 = vmatpush1.bf16.msra.mxu0 %v860
  %1254 = vmatprep.subr.bf16.mxu0 %v857
  %1255 = vmatpush1.bf16.msra.mxu0 %v856
  %1256 = vmatprep.subr.bf16.mxu0 %v917
  %1257 = vmatpush2.bf16.msra.mxu0 %v916
  %1258 = vmatprep.subr.bf16.mxu0 %v913
  %1259 = vmatpush2.bf16.msra.mxu0 %v912
  %1260 = vmatprep.subr.bf16.mxu0 %v909
  %1261 = vmatpush2.bf16.msra.mxu0 %v908
  %1262 = vmatprep.subr.bf16.mxu0 %v905
  %1263 = vmatpush2.bf16.msra.mxu0 %v904
  %1264 = vmatprep.subr.bf16.mxu0 %v901
  %1265 = vmatpush2.bf16.msra.mxu0 %v900
  %1266 = vmatprep.subr.bf16.mxu0 %v897
  %1267 = vmatpush2.bf16.msra.mxu0 %v896
  %1268 = vmatprep.subr.bf16.mxu0 %v893
  %1269 = vmatpush2.bf16.msra.mxu0 %v892
  %1270 = vmatprep.subr.bf16.mxu0 %v889
  %1271 = vmatpush2.bf16.msra.mxu0 %v888
  %1272 = vmatprep.mubr.bf16.mxu0 %v269
  %1273 = vmatmul.mubr.bf16.gmra.mxu0 %v268
  %v1274 = vpop.f32.mrf.mxu0
  %v1275 = vadd.f32 %v233, %v1274
  %v1276 = vpop.f32.mrf.mxu0
  %v1277 = vadd.f32 %v237, %v1276
  %v1278 = vpop.f32.mrf.mxu0
  %v1279 = vadd.f32 %v233, %v1278
  %v1280 = vpop.f32.mrf.mxu0
  %v1281 = vadd.f32 %v237, %v1280
  %1282 = vdwg.mxu0
  %1283 = vmatprep.subr.bf16.mxu0 %v949
  %1284 = vmatpush1.bf16.msra.mxu0 %v948
  %1285 = vmatprep.subr.bf16.mxu0 %v945
  %1286 = vmatpush1.bf16.msra.mxu0 %v944
  %1287 = vmatprep.subr.bf16.mxu0 %v941
  %1288 = vmatpush1.bf16.msra.mxu0 %v940
  %1289 = vmatprep.subr.bf16.mxu0 %v937
  %1290 = vmatpush1.bf16.msra.mxu0 %v936
  %1291 = vmatprep.subr.bf16.mxu0 %v933
  %1292 = vmatpush1.bf16.msra.mxu0 %v932
  %1293 = vmatprep.subr.bf16.mxu0 %v929
  %1294 = vmatpush1.bf16.msra.mxu0 %v928
  %1295 = vmatprep.subr.bf16.mxu0 %v925
  %1296 = vmatpush1.bf16.msra.mxu0 %v924
  %1297 = vmatprep.subr.bf16.mxu0 %v921
  %1298 = vmatpush1.bf16.msra.mxu0 %v920
  %1299 = vmatprep.subr.bf16.mxu0 %v981
  %1300 = vmatpush2.bf16.msra.mxu0 %v980
  %1301 = vmatprep.subr.bf16.mxu0 %v977
  %1302 = vmatpush2.bf16.msra.mxu0 %v976
  %1303 = vmatprep.subr.bf16.mxu0 %v973
  %1304 = vmatpush2.bf16.msra.mxu0 %v972
  %1305 = vmatprep.subr.bf16.mxu0 %v969
  %1306 = vmatpush2.bf16.msra.mxu0 %v968
  %1307 = vmatprep.subr.bf16.mxu0 %v965
  %1308 = vmatpush2.bf16.msra.mxu0 %v964
  %1309 = vmatprep.subr.bf16.mxu0 %v961
  %1310 = vmatpush2.bf16.msra.mxu0 %v960
  %1311 = vmatprep.subr.bf16.mxu0 %v957
  %1312 = vmatpush2.bf16.msra.mxu0 %v956
  %1313 = vmatprep.subr.bf16.mxu0 %v953
  %1314 = vmatpush2.bf16.msra.mxu0 %v952
  %1315 = vmatprep.mubr.bf16.mxu0 %v271
  %1316 = vmatmul.mubr.bf16.gmra.mxu0 %v270
  %v1317 = vpop.f32.mrf.mxu0
  %v1318 = vadd.f32 %v1275, %v1317
  %v1319 = vpop.f32.mrf.mxu0
  %v1320 = vadd.f32 %v1277, %v1319
  %v1321 = vpop.f32.mrf.mxu0
  %v1322 = vadd.f32 %v1279, %v1321
  %v1323 = vpop.f32.mrf.mxu0
  %v1324 = vadd.f32 %v1281, %v1323
  %1325 = vdwg.mxu0
  %1326 = vmatprep.subr.bf16.mxu0 %v1013
  %1327 = vmatpush1.bf16.msra.mxu0 %v1012
  %1328 = vmatprep.subr.bf16.mxu0 %v1009
  %1329 = vmatpush1.bf16.msra.mxu0 %v1008
  %1330 = vmatprep.subr.bf16.mxu0 %v1005
  %1331 = vmatpush1.bf16.msra.mxu0 %v1004
  %1332 = vmatprep.subr.bf16.mxu0 %v1001
  %1333 = vmatpush1.bf16.msra.mxu0 %v1000
  %1334 = vmatprep.subr.bf16.mxu0 %v997
  %1335 = vmatpush1.bf16.msra.mxu0 %v996
  %1336 = vmatprep.subr.bf16.mxu0 %v993
  %1337 = vmatpush1.bf16.msra.mxu0 %v992
  %1338 = vmatprep.subr.bf16.mxu0 %v989
  %1339 = vmatpush1.bf16.msra.mxu0 %v988
  %1340 = vmatprep.subr.bf16.mxu0 %v985
  %1341 = vmatpush1.bf16.msra.mxu0 %v984
  %1342 = vmatprep.subr.bf16.mxu0 %v1045
  %1343 = vmatpush2.bf16.msra.mxu0 %v1044
  %1344 = vmatprep.subr.bf16.mxu0 %v1041
  %1345 = vmatpush2.bf16.msra.mxu0 %v1040
  %1346 = vmatprep.subr.bf16.mxu0 %v1037
  %1347 = vmatpush2.bf16.msra.mxu0 %v1036
  %1348 = vmatprep.subr.bf16.mxu0 %v1033
  %1349 = vmatpush2.bf16.msra.mxu0 %v1032
  %1350 = vmatprep.subr.bf16.mxu0 %v1029
  %1351 = vmatpush2.bf16.msra.mxu0 %v1028
  %1352 = vmatprep.subr.bf16.mxu0 %v1025
  %1353 = vmatpush2.bf16.msra.mxu0 %v1024
  %1354 = vmatprep.subr.bf16.mxu0 %v1021
  %1355 = vmatpush2.bf16.msra.mxu0 %v1020
  %1356 = vmatprep.subr.bf16.mxu0 %v1017
  %1357 = vmatpush2.bf16.msra.mxu0 %v1016
  %1358 = vmatprep.mubr.bf16.mxu0 %v273
  %1359 = vmatmul.mubr.bf16.gmra.mxu0 %v272
  %v1360 = vpop.f32.mrf.mxu0
  %v1361 = vadd.f32 %v1318, %v1360
  %v1362 = vpop.f32.mrf.mxu0
  %v1363 = vadd.f32 %v1320, %v1362
  %v1364 = vpop.f32.mrf.mxu0
  %v1365 = vadd.f32 %v1322, %v1364
  %v1366 = vpop.f32.mrf.mxu0
  %v1367 = vadd.f32 %v1324, %v1366
  %1368 = vdwg.mxu0
  %1369 = vmatprep.subr.bf16.mxu0 %v887
  %1370 = vmatpush1.bf16.msra.mxu0 %v886
  %1371 = vmatprep.subr.bf16.mxu0 %v883
  %1372 = vmatpush1.bf16.msra.mxu0 %v882
  %1373 = vmatprep.subr.bf16.mxu0 %v879
  %1374 = vmatpush1.bf16.msra.mxu0 %v878
  %1375 = vmatprep.subr.bf16.mxu0 %v875
  %1376 = vmatpush1.bf16.msra.mxu0 %v874
  %1377 = vmatprep.subr.bf16.mxu0 %v871
  %1378 = vmatpush1.bf16.msra.mxu0 %v870
  %1379 = vmatprep.subr.bf16.mxu0 %v867
  %1380 = vmatpush1.bf16.msra.mxu0 %v866
  %1381 = vmatprep.subr.bf16.mxu0 %v863
  %1382 = vmatpush1.bf16.msra.mxu0 %v862
  %1383 = vmatprep.subr.bf16.mxu0 %v859
  %1384 = vmatpush1.bf16.msra.mxu0 %v858
  %1385 = vmatprep.subr.bf16.mxu0 %v919
  %1386 = vmatpush2.bf16.msra.mxu0 %v918
  %1387 = vmatprep.subr.bf16.mxu0 %v915
  %1388 = vmatpush2.bf16.msra.mxu0 %v914
  %1389 = vmatprep.subr.bf16.mxu0 %v911
  %1390 = vmatpush2.bf16.msra.mxu0 %v910
  %1391 = vmatprep.subr.bf16.mxu0 %v907
  %1392 = vmatpush2.bf16.msra.mxu0 %v906
  %1393 = vmatprep.subr.bf16.mxu0 %v903
  %1394 = vmatpush2.bf16.msra.mxu0 %v902
  %1395 = vmatprep.subr.bf16.mxu0 %v899
  %1396 = vmatpush2.bf16.msra.mxu0 %v898
  %1397 = vmatprep.subr.bf16.mxu0 %v895
  %1398 = vmatpush2.bf16.msra.mxu0 %v894
  %1399 = vmatprep.subr.bf16.mxu0 %v891
  %1400 = vmatpush2.bf16.msra.mxu0 %v890
  %1401 = vmatprep.mubr.bf16.mxu0 %v269
  %1402 = vmatmul.mubr.bf16.gmra.mxu0 %v268
  %v1403 = vpop.f32.mrf.mxu0
  %v1404 = vadd.f32 %v241, %v1403
  %v1405 = vpop.f32.mrf.mxu0
  %v1406 = vadd.f32 %v245, %v1405
  %v1407 = vpop.f32.mrf.mxu0
  %v1408 = vadd.f32 %v241, %v1407
  %v1409 = vpop.f32.mrf.mxu0
  %v1410 = vadd.f32 %v245, %v1409
  %1411 = vdwg.mxu0
  %1412 = vmatprep.subr.bf16.mxu0 %v951
  %1413 = vmatpush1.bf16.msra.mxu0 %v950
  %1414 = vmatprep.subr.bf16.mxu0 %v947
  %1415 = vmatpush1.bf16.msra.mxu0 %v946
  %1416 = vmatprep.subr.bf16.mxu0 %v943
  %1417 = vmatpush1.bf16.msra.mxu0 %v942
  %1418 = vmatprep.subr.bf16.mxu0 %v939
  %1419 = vmatpush1.bf16.msra.mxu0 %v938
  %1420 = vmatprep.subr.bf16.mxu0 %v935
  %1421 = vmatpush1.bf16.msra.mxu0 %v934
  %1422 = vmatprep.subr.bf16.mxu0 %v931
  %1423 = vmatpush1.bf16.msra.mxu0 %v930
  %1424 = vmatprep.subr.bf16.mxu0 %v927
  %1425 = vmatpush1.bf16.msra.mxu0 %v926
  %1426 = vmatprep.subr.bf16.mxu0 %v923
  %1427 = vmatpush1.bf16.msra.mxu0 %v922
  %1428 = vmatprep.subr.bf16.mxu0 %v983
  %1429 = vmatpush2.bf16.msra.mxu0 %v982
  %1430 = vmatprep.subr.bf16.mxu0 %v979
  %1431 = vmatpush2.bf16.msra.mxu0 %v978
  %1432 = vmatprep.subr.bf16.mxu0 %v975
  %1433 = vmatpush2.bf16.msra.mxu0 %v974
  %1434 = vmatprep.subr.bf16.mxu0 %v971
  %1435 = vmatpush2.bf16.msra.mxu0 %v970
  %1436 = vmatprep.subr.bf16.mxu0 %v967
  %1437 = vmatpush2.bf16.msra.mxu0 %v966
  %1438 = vmatprep.subr.bf16.mxu0 %v963
  %1439 = vmatpush2.bf16.msra.mxu0 %v962
  %1440 = vmatprep.subr.bf16.mxu0 %v959
  %1441 = vmatpush2.bf16.msra.mxu0 %v958
  %1442 = vmatprep.subr.bf16.mxu0 %v955
  %1443 = vmatpush2.bf16.msra.mxu0 %v954
  %1444 = vmatprep.mubr.bf16.mxu0 %v271
  %1445 = vmatmul.mubr.bf16.gmra.mxu0 %v270
  %v1446 = vpop.f32.mrf.mxu0
  %v1447 = vadd.f32 %v1404, %v1446
  %v1448 = vpop.f32.mrf.mxu0
  %v1449 = vadd.f32 %v1406, %v1448
  %v1450 = vpop.f32.mrf.mxu0
  %v1451 = vadd.f32 %v1408, %v1450
  %v1452 = vpop.f32.mrf.mxu0
  %v1453 = vadd.f32 %v1410, %v1452
  %1454 = vdwg.mxu0
  %1455 = vmatprep.subr.bf16.mxu0 %v1015
  %1456 = vmatpush1.bf16.msra.mxu0 %v1014
  %1457 = vmatprep.subr.bf16.mxu0 %v1011
  %1458 = vmatpush1.bf16.msra.mxu0 %v1010
  %1459 = vmatprep.subr.bf16.mxu0 %v1007
  %1460 = vmatpush1.bf16.msra.mxu0 %v1006
  %1461 = vmatprep.subr.bf16.mxu0 %v1003
  %1462 = vmatpush1.bf16.msra.mxu0 %v1002
  %1463 = vmatprep.subr.bf16.mxu0 %v999
  %1464 = vmatpush1.bf16.msra.mxu0 %v998
  %1465 = vmatprep.subr.bf16.mxu0 %v995
  %1466 = vmatpush1.bf16.msra.mxu0 %v994
  %1467 = vmatprep.subr.bf16.mxu0 %v991
  %1468 = vmatpush1.bf16.msra.mxu0 %v990
  %1469 = vmatprep.subr.bf16.mxu0 %v987
  %1470 = vmatpush1.bf16.msra.mxu0 %v986
  %1471 = vmatprep.subr.bf16.mxu0 %v1047
  %1472 = vmatpush2.bf16.msra.mxu0 %v1046
  %1473 = vmatprep.subr.bf16.mxu0 %v1043
  %1474 = vmatpush2.bf16.msra.mxu0 %v1042
  %1475 = vmatprep.subr.bf16.mxu0 %v1039
  %1476 = vmatpush2.bf16.msra.mxu0 %v1038
  %1477 = vmatprep.subr.bf16.mxu0 %v1035
  %1478 = vmatpush2.bf16.msra.mxu0 %v1034
  %1479 = vmatprep.subr.bf16.mxu0 %v1031
  %1480 = vmatpush2.bf16.msra.mxu0 %v1030
  %1481 = vmatprep.subr.bf16.mxu0 %v1027
  %1482 = vmatpush2.bf16.msra.mxu0 %v1026
  %1483 = vmatprep.subr.bf16.mxu0 %v1023
  %1484 = vmatpush2.bf16.msra.mxu0 %v1022
  %1485 = vmatprep.subr.bf16.mxu0 %v1019
  %1486 = vmatpush2.bf16.msra.mxu0 %v1018
  %1487 = vmatprep.mubr.bf16.mxu0 %v273
  %1488 = vmatmul.mubr.bf16.gmra.mxu0 %v272
  %v1489 = vpop.f32.mrf.mxu0
  %v1490 = vadd.f32 %v1447, %v1489
  %v1491 = vpop.f32.mrf.mxu0
  %v1492 = vadd.f32 %v1449, %v1491
  %v1493 = vpop.f32.mrf.mxu0
  %v1494 = vadd.f32 %v1451, %v1493
  %v1495 = vpop.f32.mrf.mxu0
  %v1496 = vadd.f32 %v1453, %v1495
  %1497 = vdwg.mxu0
  %v1498 = vmax.f32 %v1361, 0.0
  %v1499 = vmax.f32 %v1363, 0.0
  %v1500 = vmax.f32 %v1490, 0.0
  %v1501 = vmax.f32 %v1492, 0.0
  %v1502 = vmax.f32 %v1365, 0.0
  %v1503 = vmax.f32 %v1367, 0.0
  %v1504 = vmax.f32 %v1494, 0.0
  %v1505 = vmax.f32 %v1496, 0.0
  %v1506 = vpack.c.bf16 %v1502, %v1498
  %v1507 = vpack.c.bf16 %v1503, %v1499
  %v1508 = vpack.c.bf16 %v1504, %v1500
  %v1509 = vpack.c.bf16 %v1505, %v1501
  %v1510 = vld [vmem:[%s4] sm:$0xff]
  %v1511 = vld [vmem:[%s4 + $0x8] sm:$0xff]
  %v1512 = vld [vmem:[%s4 + $0x10] sm:$0xff]
  %v1513 = vld [vmem:[%s4 + $0x18] sm:$0xff]
  %v1514 = vld [vmem:[%s4 + $0x20] sm:$0xff]
  %v1515 = vld [vmem:[%s4 + $0x28] sm:$0xff]
  %v1516 = vld [vmem:[%s4 + $0x30] sm:$0xff]
  %v1517 = vld [vmem:[%s4 + $0x38] sm:$0xff]
  %v1518 = vld [vmem:[%s4 + $0x40] sm:$0xff]
  %v1519 = vld [vmem:[%s4 + $0x48] sm:$0xff]
  %v1520 = vld [vmem:[%s4 + $0x50] sm:$0xff]
  %v1521 = vld [vmem:[%s4 + $0x58] sm:$0xff]
  %v1522 = vld [vmem:[%s4 + $0x60] sm:$0xff]
  %v1523 = vld [vmem:[%s4 + $0x68] sm:$0xff]
  %v1524 = vld [vmem:[%s4 + $0x70] sm:$0xff]
  %v1525 = vld [vmem:[%s4 + $0x78] sm:$0xff]
  %v1526 = vld [vmem:[%s4 + $0x80] sm:$0xff]
  %v1527 = vld [vmem:[%s4 + $0x88] sm:$0xff]
  %v1528 = vld [vmem:[%s4 + $0x90] sm:$0xff]
  %v1529 = vld [vmem:[%s4 + $0x98] sm:$0xff]
  %v1530 = vld [vmem:[%s4 + $0xa0] sm:$0xff]
  %v1531 = vld [vmem:[%s4 + $0xa8] sm:$0xff]
  %v1532 = vld [vmem:[%s4 + $0xb0] sm:$0xff]
  %v1533 = vld [vmem:[%s4 + $0xb8] sm:$0xff]
  %v1534 = vld [vmem:[%s4 + $0xc0] sm:$0xff]
  %v1535 = vld [vmem:[%s4 + $0xc8] sm:$0xff]
  %v1536 = vld [vmem:[%s4 + $0xd0] sm:$0xff]
  %v1537 = vld [vmem:[%s4 + $0xd8] sm:$0xff]
  %v1538 = vld [vmem:[%s4 + $0xe0] sm:$0xff]
  %v1539 = vld [vmem:[%s4 + $0xe8] sm:$0xff]
  %v1540 = vld [vmem:[%s4 + $0xf0] sm:$0xff]
  %v1541 = vld [vmem:[%s4 + $0xf8] sm:$0xff]
  %v1542 = vld [vmem:[%s4 + $0x100] sm:$0xff]
  %v1543 = vld [vmem:[%s4 + $0x108] sm:$0xff]
  %v1544 = vld [vmem:[%s4 + $0x110] sm:$0xff]
  %v1545 = vld [vmem:[%s4 + $0x118] sm:$0xff]
  %v1546 = vld [vmem:[%s4 + $0x120] sm:$0xff]
  %v1547 = vld [vmem:[%s4 + $0x128] sm:$0xff]
  %v1548 = vld [vmem:[%s4 + $0x130] sm:$0xff]
  %v1549 = vld [vmem:[%s4 + $0x138] sm:$0xff]
  %v1550 = vld [vmem:[%s4 + $0x140] sm:$0xff]
  %v1551 = vld [vmem:[%s4 + $0x148] sm:$0xff]
  %v1552 = vld [vmem:[%s4 + $0x150] sm:$0xff]
  %v1553 = vld [vmem:[%s4 + $0x158] sm:$0xff]
  %v1554 = vld [vmem:[%s4 + $0x160] sm:$0xff]
  %v1555 = vld [vmem:[%s4 + $0x168] sm:$0xff]
  %v1556 = vld [vmem:[%s4 + $0x170] sm:$0xff]
  %v1557 = vld [vmem:[%s4 + $0x178] sm:$0xff]
  %v1558 = vld [vmem:[%s4 + $0x180] sm:$0xff]
  %v1559 = vld [vmem:[%s4 + $0x188] sm:$0xff]
  %v1560 = vld [vmem:[%s4 + $0x190] sm:$0xff]
  %v1561 = vld [vmem:[%s4 + $0x198] sm:$0xff]
  %v1562 = vld [vmem:[%s4 + $0x1a0] sm:$0xff]
  %v1563 = vld [vmem:[%s4 + $0x1a8] sm:$0xff]
  %v1564 = vld [vmem:[%s4 + $0x1b0] sm:$0xff]
  %v1565 = vld [vmem:[%s4 + $0x1b8] sm:$0xff]
  %v1566 = vld [vmem:[%s4 + $0x1c0] sm:$0xff]
  %v1567 = vld [vmem:[%s4 + $0x1c8] sm:$0xff]
  %v1568 = vld [vmem:[%s4 + $0x1d0] sm:$0xff]
  %v1569 = vld [vmem:[%s4 + $0x1d8] sm:$0xff]
  %v1570 = vld [vmem:[%s4 + $0x1e0] sm:$0xff]
  %v1571 = vld [vmem:[%s4 + $0x1e8] sm:$0xff]
  %v1572 = vld [vmem:[%s4 + $0x1f0] sm:$0xff]
  %v1573 = vld [vmem:[%s4 + $0x1f8] sm:$0xff]
  %v1574 = vld [vmem:[%s5] sm:$0x3]
  %v1576 = vlaneseq
  %v1577 = vshrl.u32 %v1576, 7
  %v1578 = vsub.s32 0, %v1577
  %v1579 = vrot.slane %v1574, %v1578
  %v1580 = vlaneseq
  %v1581 = vshrl.u32 %v1580, 7
  %v1582 = vsub.s32 1, %v1581
  %v1583 = vrot.slane %v1574, %v1582
  %v1650 = vunpack.c.l.b16 %v1510
  %v1651 = vunpack.c.h.b16 %v1510
  %v1652 = vunpack.c.l.b16 %v1511
  %v1653 = vunpack.c.h.b16 %v1511
  %v1654 = vunpack.c.l.b16 %v1512
  %v1655 = vunpack.c.h.b16 %v1512
  %v1656 = vunpack.c.l.b16 %v1513
  %v1657 = vunpack.c.h.b16 %v1513
  %v1658 = vunpack.c.l.b16 %v1514
  %v1659 = vunpack.c.h.b16 %v1514
  %v1660 = vunpack.c.l.b16 %v1515
  %v1661 = vunpack.c.h.b16 %v1515
  %v1662 = vunpack.c.l.b16 %v1516
  %v1663 = vunpack.c.h.b16 %v1516
  %v1664 = vunpack.c.l.b16 %v1517
  %v1665 = vunpack.c.h.b16 %v1517
  %v1666 = vunpack.c.l.b16 %v1518
  %v1667 = vunpack.c.h.b16 %v1518
  %v1668 = vunpack.c.l.b16 %v1519
  %v1669 = vunpack.c.h.b16 %v1519
  %v1670 = vunpack.c.l.b16 %v1520
  %v1671 = vunpack.c.h.b16 %v1520
  %v1672 = vunpack.c.l.b16 %v1521
  %v1673 = vunpack.c.h.b16 %v1521
  %v1674 = vunpack.c.l.b16 %v1522
  %v1675 = vunpack.c.h.b16 %v1522
  %v1676 = vunpack.c.l.b16 %v1523
  %v1677 = vunpack.c.h.b16 %v1523
  %v1678 = vunpack.c.l.b16 %v1524
  %v1679 = vunpack.c.h.b16 %v1524
  %v1680 = vunpack.c.l.b16 %v1525
  %v1681 = vunpack.c.h.b16 %v1525
  %v1682 = vunpack.c.l.b16 %v1526
  %v1683 = vunpack.c.h.b16 %v1526
  %v1684 = vunpack.c.l.b16 %v1527
  %v1685 = vunpack.c.h.b16 %v1527
  %v1686 = vunpack.c.l.b16 %v1528
  %v1687 = vunpack.c.h.b16 %v1528
  %v1688 = vunpack.c.l.b16 %v1529
  %v1689 = vunpack.c.h.b16 %v1529
  %v1690 = vunpack.c.l.b16 %v1530
  %v1691 = vunpack.c.h.b16 %v1530
  %v1692 = vunpack.c.l.b16 %v1531
  %v1693 = vunpack.c.h.b16 %v1531
  %v1694 = vunpack.c.l.b16 %v1532
  %v1695 = vunpack.c.h.b16 %v1532
  %v1696 = vunpack.c.l.b16 %v1533
  %v1697 = vunpack.c.h.b16 %v1533
  %v1698 = vunpack.c.l.b16 %v1534
  %v1699 = vunpack.c.h.b16 %v1534
  %v1700 = vunpack.c.l.b16 %v1535
  %v1701 = vunpack.c.h.b16 %v1535
  %v1702 = vunpack.c.l.b16 %v1536
  %v1703 = vunpack.c.h.b16 %v1536
  %v1704 = vunpack.c.l.b16 %v1537
  %v1705 = vunpack.c.h.b16 %v1537
  %v1706 = vunpack.c.l.b16 %v1538
  %v1707 = vunpack.c.h.b16 %v1538
  %v1708 = vunpack.c.l.b16 %v1539
  %v1709 = vunpack.c.h.b16 %v1539
  %v1710 = vunpack.c.l.b16 %v1540
  %v1711 = vunpack.c.h.b16 %v1540
  %v1712 = vunpack.c.l.b16 %v1541
  %v1713 = vunpack.c.h.b16 %v1541
  %v1714 = vunpack.c.l.b16 %v1542
  %v1715 = vunpack.c.h.b16 %v1542
  %v1716 = vunpack.c.l.b16 %v1543
  %v1717 = vunpack.c.h.b16 %v1543
  %v1718 = vunpack.c.l.b16 %v1544
  %v1719 = vunpack.c.h.b16 %v1544
  %v1720 = vunpack.c.l.b16 %v1545
  %v1721 = vunpack.c.h.b16 %v1545
  %v1722 = vunpack.c.l.b16 %v1546
  %v1723 = vunpack.c.h.b16 %v1546
  %v1724 = vunpack.c.l.b16 %v1547
  %v1725 = vunpack.c.h.b16 %v1547
  %v1726 = vunpack.c.l.b16 %v1548
  %v1727 = vunpack.c.h.b16 %v1548
  %v1728 = vunpack.c.l.b16 %v1549
  %v1729 = vunpack.c.h.b16 %v1549
  %v1730 = vunpack.c.l.b16 %v1550
  %v1731 = vunpack.c.h.b16 %v1550
  %v1732 = vunpack.c.l.b16 %v1551
  %v1733 = vunpack.c.h.b16 %v1551
  %v1734 = vunpack.c.l.b16 %v1552
  %v1735 = vunpack.c.h.b16 %v1552
  %v1736 = vunpack.c.l.b16 %v1553
  %v1737 = vunpack.c.h.b16 %v1553
  %v1738 = vunpack.c.l.b16 %v1554
  %v1739 = vunpack.c.h.b16 %v1554
  %v1740 = vunpack.c.l.b16 %v1555
  %v1741 = vunpack.c.h.b16 %v1555
  %v1742 = vunpack.c.l.b16 %v1556
  %v1743 = vunpack.c.h.b16 %v1556
  %v1744 = vunpack.c.l.b16 %v1557
  %v1745 = vunpack.c.h.b16 %v1557
  %v1746 = vunpack.c.l.b16 %v1558
  %v1747 = vunpack.c.h.b16 %v1558
  %v1748 = vunpack.c.l.b16 %v1559
  %v1749 = vunpack.c.h.b16 %v1559
  %v1750 = vunpack.c.l.b16 %v1560
  %v1751 = vunpack.c.h.b16 %v1560
  %v1752 = vunpack.c.l.b16 %v1561
  %v1753 = vunpack.c.h.b16 %v1561
  %v1754 = vunpack.c.l.b16 %v1562
  %v1755 = vunpack.c.h.b16 %v1562
  %v1756 = vunpack.c.l.b16 %v1563
  %v1757 = vunpack.c.h.b16 %v1563
  %v1758 = vunpack.c.l.b16 %v1564
  %v1759 = vunpack.c.h.b16 %v1564
  %v1760 = vunpack.c.l.b16 %v1565
  %v1761 = vunpack.c.h.b16 %v1565
  %v1762 = vunpack.c.l.b16 %v1566
  %v1763 = vunpack.c.h.b16 %v1566
  %v1764 = vunpack.c.l.b16 %v1567
  %v1765 = vunpack.c.h.b16 %v1567
  %v1766 = vunpack.c.l.b16 %v1568
  %v1767 = vunpack.c.h.b16 %v1568
  %v1768 = vunpack.c.l.b16 %v1569
  %v1769 = vunpack.c.h.b16 %v1569
  %v1770 = vunpack.c.l.b16 %v1570
  %v1771 = vunpack.c.h.b16 %v1570
  %v1772 = vunpack.c.l.b16 %v1571
  %v1773 = vunpack.c.h.b16 %v1571
  %v1774 = vunpack.c.l.b16 %v1572
  %v1775 = vunpack.c.h.b16 %v1572
  %v1776 = vunpack.c.l.b16 %v1573
  %v1777 = vunpack.c.h.b16 %v1573
  %v1778 = vpack.c.b16 %v1652, %v1650
  %v1779 = vpack.c.b16 %v1653, %v1651
  %v1780 = vpack.c.b16 %v1656, %v1654
  %v1781 = vpack.c.b16 %v1657, %v1655
  %v1782 = vpack.c.b16 %v1660, %v1658
  %v1783 = vpack.c.b16 %v1661, %v1659
  %v1784 = vpack.c.b16 %v1664, %v1662
  %v1785 = vpack.c.b16 %v1665, %v1663
  %v1786 = vpack.c.b16 %v1668, %v1666
  %v1787 = vpack.c.b16 %v1669, %v1667
  %v1788 = vpack.c.b16 %v1672, %v1670
  %v1789 = vpack.c.b16 %v1673, %v1671
  %v1790 = vpack.c.b16 %v1676, %v1674
  %v1791 = vpack.c.b16 %v1677, %v1675
  %v1792 = vpack.c.b16 %v1680, %v1678
  %v1793 = vpack.c.b16 %v1681, %v1679
  %v1794 = vpack.c.b16 %v1684, %v1682
  %v1795 = vpack.c.b16 %v1685, %v1683
  %v1796 = vpack.c.b16 %v1688, %v1686
  %v1797 = vpack.c.b16 %v1689, %v1687
  %v1798 = vpack.c.b16 %v1692, %v1690
  %v1799 = vpack.c.b16 %v1693, %v1691
  %v1800 = vpack.c.b16 %v1696, %v1694
  %v1801 = vpack.c.b16 %v1697, %v1695
  %v1802 = vpack.c.b16 %v1700, %v1698
  %v1803 = vpack.c.b16 %v1701, %v1699
  %v1804 = vpack.c.b16 %v1704, %v1702
  %v1805 = vpack.c.b16 %v1705, %v1703
  %v1806 = vpack.c.b16 %v1708, %v1706
  %v1807 = vpack.c.b16 %v1709, %v1707
  %v1808 = vpack.c.b16 %v1712, %v1710
  %v1809 = vpack.c.b16 %v1713, %v1711
  %v1810 = vpack.c.b16 %v1716, %v1714
  %v1811 = vpack.c.b16 %v1717, %v1715
  %v1812 = vpack.c.b16 %v1720, %v1718
  %v1813 = vpack.c.b16 %v1721, %v1719
  %v1814 = vpack.c.b16 %v1724, %v1722
  %v1815 = vpack.c.b16 %v1725, %v1723
  %v1816 = vpack.c.b16 %v1728, %v1726
  %v1817 = vpack.c.b16 %v1729, %v1727
  %v1818 = vpack.c.b16 %v1732, %v1730
  %v1819 = vpack.c.b16 %v1733, %v1731
  %v1820 = vpack.c.b16 %v1736, %v1734
  %v1821 = vpack.c.b16 %v1737, %v1735
  %v1822 = vpack.c.b16 %v1740, %v1738
  %v1823 = vpack.c.b16 %v1741, %v1739
  %v1824 = vpack.c.b16 %v1744, %v1742
  %v1825 = vpack.c.b16 %v1745, %v1743
  %v1826 = vpack.c.b16 %v1748, %v1746
  %v1827 = vpack.c.b16 %v1749, %v1747
  %v1828 = vpack.c.b16 %v1752, %v1750
  %v1829 = vpack.c.b16 %v1753, %v1751
  %v1830 = vpack.c.b16 %v1756, %v1754
  %v1831 = vpack.c.b16 %v1757, %v1755
  %v1832 = vpack.c.b16 %v1760, %v1758
  %v1833 = vpack.c.b16 %v1761, %v1759
  %v1834 = vpack.c.b16 %v1764, %v1762
  %v1835 = vpack.c.b16 %v1765, %v1763
  %v1836 = vpack.c.b16 %v1768, %v1766
  %v1837 = vpack.c.b16 %v1769, %v1767
  %v1838 = vpack.c.b16 %v1772, %v1770
  %v1839 = vpack.c.b16 %v1773, %v1771
  %v1840 = vpack.c.b16 %v1776, %v1774
  %v1841 = vpack.c.b16 %v1777, %v1775
  %1906 = vmatprep.subr.bf16.mxu0 %v1793
  %1907 = vmatpush1.bf16.msra.mxu0 %v1792
  %1908 = vmatprep.subr.bf16.mxu0 %v1791
  %1909 = vmatpush1.bf16.msra.mxu0 %v1790
  %1910 = vmatprep.subr.bf16.mxu0 %v1789
  %1911 = vmatpush1.bf16.msra.mxu0 %v1788
  %1912 = vmatprep.subr.bf16.mxu0 %v1787
  %1913 = vmatpush1.bf16.msra.mxu0 %v1786
  %1914 = vmatprep.subr.bf16.mxu0 %v1785
  %1915 = vmatpush1.bf16.msra.mxu0 %v1784
  %1916 = vmatprep.subr.bf16.mxu0 %v1783
  %1917 = vmatpush1.bf16.msra.mxu0 %v1782
  %1918 = vmatprep.subr.bf16.mxu0 %v1781
  %1919 = vmatpush1.bf16.msra.mxu0 %v1780
  %1920 = vmatprep.subr.bf16.mxu0 %v1779
  %1921 = vmatpush1.bf16.msra.mxu0 %v1778
  %1922 = vmatprep.subr.bf16.mxu0 %v1809
  %1923 = vmatpush2.bf16.msra.mxu0 %v1808
  %1924 = vmatprep.subr.bf16.mxu0 %v1807
  %1925 = vmatpush2.bf16.msra.mxu0 %v1806
  %1926 = vmatprep.subr.bf16.mxu0 %v1805
  %1927 = vmatpush2.bf16.msra.mxu0 %v1804
  %1928 = vmatprep.subr.bf16.mxu0 %v1803
  %1929 = vmatpush2.bf16.msra.mxu0 %v1802
  %1930 = vmatprep.subr.bf16.mxu0 %v1801
  %1931 = vmatpush2.bf16.msra.mxu0 %v1800
  %1932 = vmatprep.subr.bf16.mxu0 %v1799
  %1933 = vmatpush2.bf16.msra.mxu0 %v1798
  %1934 = vmatprep.subr.bf16.mxu0 %v1797
  %1935 = vmatpush2.bf16.msra.mxu0 %v1796
  %1936 = vmatprep.subr.bf16.mxu0 %v1795
  %1937 = vmatpush2.bf16.msra.mxu0 %v1794
  %1938 = vmatprep.mubr.bf16.mxu0 %v1507
  %1939 = vmatmul.mubr.bf16.gmra.mxu0 %v1506
  %v1940 = vpop.f32.mrf.mxu0
  %v1941 = vadd.f32 %v1579, %v1940
  %v1942 = vpop.f32.mrf.mxu0
  %v1943 = vadd.f32 %v1583, %v1942
  %v1944 = vpop.f32.mrf.mxu0
  %v1945 = vadd.f32 %v1579, %v1944
  %v1946 = vpop.f32.mrf.mxu0
  %v1947 = vadd.f32 %v1583, %v1946
  %1948 = vdwg.mxu0
  %1949 = vmatprep.subr.bf16.mxu0 %v1825
  %1950 = vmatpush1.bf16.msra.mxu0 %v1824
  %1951 = vmatprep.subr.bf16.mxu0 %v1823
  %1952 = vmatpush1.bf16.msra.mxu0 %v1822
  %1953 = vmatprep.subr.bf16.mxu0 %v1821
  %1954 = vmatpush1.bf16.msra.mxu0 %v1820
  %1955 = vmatprep.subr.bf16.mxu0 %v1819
  %1956 = vmatpush1.bf16.msra.mxu0 %v1818
  %1957 = vmatprep.subr.bf16.mxu0 %v1817
  %1958 = vmatpush1.bf16.msra.mxu0 %v1816
  %1959 = vmatprep.subr.bf16.mxu0 %v1815
  %1960 = vmatpush1.bf16.msra.mxu0 %v1814
  %1961 = vmatprep.subr.bf16.mxu0 %v1813
  %1962 = vmatpush1.bf16.msra.mxu0 %v1812
  %1963 = vmatprep.subr.bf16.mxu0 %v1811
  %1964 = vmatpush1.bf16.msra.mxu0 %v1810
  %1965 = vmatprep.subr.bf16.mxu0 %v1841
  %1966 = vmatpush2.bf16.msra.mxu0 %v1840
  %1967 = vmatprep.subr.bf16.mxu0 %v1839
  %1968 = vmatpush2.bf16.msra.mxu0 %v1838
  %1969 = vmatprep.subr.bf16.mxu0 %v1837
  %1970 = vmatpush2.bf16.msra.mxu0 %v1836
  %1971 = vmatprep.subr.bf16.mxu0 %v1835
  %1972 = vmatpush2.bf16.msra.mxu0 %v1834
  %1973 = vmatprep.subr.bf16.mxu0 %v1833
  %1974 = vmatpush2.bf16.msra.mxu0 %v1832
  %1975 = vmatprep.subr.bf16.mxu0 %v1831
  %1976 = vmatpush2.bf16.msra.mxu0 %v1830
  %1977 = vmatprep.subr.bf16.mxu0 %v1829
  %1978 = vmatpush2.bf16.msra.mxu0 %v1828
  %1979 = vmatprep.subr.bf16.mxu0 %v1827
  %1980 = vmatpush2.bf16.msra.mxu0 %v1826
  %1981 = vmatprep.mubr.bf16.mxu0 %v1509
  %1982 = vmatmul.mubr.bf16.gmra.mxu0 %v1508
  %v1983 = vpop.f32.mrf.mxu0
  %v1984 = vadd.f32 %v1941, %v1983
  %v1985 = vpop.f32.mrf.mxu0
  %v1986 = vadd.f32 %v1943, %v1985
  %v1987 = vpop.f32.mrf.mxu0
  %v1988 = vadd.f32 %v1945, %v1987
  %v1989 = vpop.f32.mrf.mxu0
  %v1990 = vadd.f32 %v1947, %v1989
  %1991 = vdwg.mxu0
  %v1992 = vmax.f32 %v1984, 0.0
  %v1993 = vmax.f32 %v1986, 0.0
  %v1994 = vmax.f32 %v1988, 0.0
  %v1995 = vmax.f32 %v1990, 0.0
  %v1996 = vpack.c.bf16 %v1994, %v1992
  %v1997 = vpack.c.bf16 %v1995, %v1993
  %v1998 = vld [vmem:[%s6] sm:$0xf]
  %v1999 = vld [vmem:[%s6 + $0x4] sm:$0xf]
  %v2000 = vld [vmem:[%s6 + $0x8] sm:$0xf]
  %v2001 = vld [vmem:[%s6 + $0xc] sm:$0xf]
  %v2002 = vld [vmem:[%s6 + $0x10] sm:$0xf]
  %v2003 = vld [vmem:[%s6 + $0x14] sm:$0xf]
  %v2004 = vld [vmem:[%s6 + $0x18] sm:$0xf]
  %v2005 = vld [vmem:[%s6 + $0x1c] sm:$0xf]
  %v2006 = vld [vmem:[%s6 + $0x20] sm:$0xf]
  %v2007 = vld [vmem:[%s6 + $0x24] sm:$0xf]
  %v2008 = vld [vmem:[%s6 + $0x28] sm:$0xf]
  %v2009 = vld [vmem:[%s6 + $0x2c] sm:$0xf]
  %v2010 = vld [vmem:[%s6 + $0x30] sm:$0xf]
  %v2011 = vld [vmem:[%s6 + $0x34] sm:$0xf]
  %v2012 = vld [vmem:[%s6 + $0x38] sm:$0xf]
  %v2013 = vld [vmem:[%s6 + $0x3c] sm:$0xf]
  %v2014 = vld [vmem:[%s6 + $0x40] sm:$0xf]
  %v2015 = vld [vmem:[%s6 + $0x44] sm:$0xf]
  %v2016 = vld [vmem:[%s6 + $0x48] sm:$0xf]
  %v2017 = vld [vmem:[%s6 + $0x4c] sm:$0xf]
  %v2018 = vld [vmem:[%s6 + $0x50] sm:$0xf]
  %v2019 = vld [vmem:[%s6 + $0x54] sm:$0xf]
  %v2020 = vld [vmem:[%s6 + $0x58] sm:$0xf]
  %v2021 = vld [vmem:[%s6 + $0x5c] sm:$0xf]
  %v2022 = vld [vmem:[%s6 + $0x60] sm:$0xf]
  %v2023 = vld [vmem:[%s6 + $0x64] sm:$0xf]
  %v2024 = vld [vmem:[%s6 + $0x68] sm:$0xf]
  %v2025 = vld [vmem:[%s6 + $0x6c] sm:$0xf]
  %v2026 = vld [vmem:[%s6 + $0x70] sm:$0xf]
  %v2027 = vld [vmem:[%s6 + $0x74] sm:$0xf]
  %v2028 = vld [vmem:[%s6 + $0x78] sm:$0xf]
  %v2029 = vld [vmem:[%s6 + $0x7c] sm:$0xf]
  %v2030 = vld [vmem:[%s7] sm:$0x1]
  %v2032 = vlaneseq
  %v2033 = vshrl.u32 %v2032, 7
  %v2034 = vsub.s32 0, %v2033
  %v2035 = vrot.slane %v2030, %v2034
  %v2069 = vunpack.c.l.b16 %v1998
  %v2070 = vunpack.c.l.b16 %v1999
  %v2071 = vunpack.c.l.b16 %v2000
  %v2072 = vunpack.c.l.b16 %v2001
  %v2073 = vunpack.c.l.b16 %v2002
  %v2074 = vunpack.c.l.b16 %v2003
  %v2075 = vunpack.c.l.b16 %v2004
  %v2076 = vunpack.c.l.b16 %v2005
  %v2077 = vunpack.c.l.b16 %v2006
  %v2078 = vunpack.c.l.b16 %v2007
  %v2079 = vunpack.c.l.b16 %v2008
  %v2080 = vunpack.c.l.b16 %v2009
  %v2081 = vunpack.c.l.b16 %v2010
  %v2082 = vunpack.c.l.b16 %v2011
  %v2083 = vunpack.c.l.b16 %v2012
  %v2084 = vunpack.c.l.b16 %v2013
  %v2085 = vunpack.c.l.b16 %v2014
  %v2086 = vunpack.c.l.b16 %v2015
  %v2087 = vunpack.c.l.b16 %v2016
  %v2088 = vunpack.c.l.b16 %v2017
  %v2089 = vunpack.c.l.b16 %v2018
  %v2090 = vunpack.c.l.b16 %v2019
  %v2091 = vunpack.c.l.b16 %v2020
  %v2092 = vunpack.c.l.b16 %v2021
  %v2093 = vunpack.c.l.b16 %v2022
  %v2094 = vunpack.c.l.b16 %v2023
  %v2095 = vunpack.c.l.b16 %v2024
  %v2096 = vunpack.c.l.b16 %v2025
  %v2097 = vunpack.c.l.b16 %v2026
  %v2098 = vunpack.c.l.b16 %v2027
  %v2099 = vunpack.c.l.b16 %v2028
  %v2100 = vunpack.c.l.b16 %v2029
  %v2101 = vpack.c.b16 %v2070, %v2069
  %v2102 = vpack.c.b16 %v2072, %v2071
  %v2103 = vpack.c.b16 %v2074, %v2073
  %v2104 = vpack.c.b16 %v2076, %v2075
  %v2105 = vpack.c.b16 %v2078, %v2077
  %v2106 = vpack.c.b16 %v2080, %v2079
  %v2107 = vpack.c.b16 %v2082, %v2081
  %v2108 = vpack.c.b16 %v2084, %v2083
  %v2109 = vpack.c.b16 %v2086, %v2085
  %v2110 = vpack.c.b16 %v2088, %v2087
  %v2111 = vpack.c.b16 %v2090, %v2089
  %v2112 = vpack.c.b16 %v2092, %v2091
  %v2113 = vpack.c.b16 %v2094, %v2093
  %v2114 = vpack.c.b16 %v2096, %v2095
  %v2115 = vpack.c.b16 %v2098, %v2097
  %v2116 = vpack.c.b16 %v2100, %v2099
  %2133 = vmatprep.subr.bf16.mxu0 0
  %2134 = vmatpush1.bf16.msra.mxu0 %v2108
  %2135 = vmatprep.subr.bf16.mxu0 0
  %2136 = vmatpush1.bf16.msra.mxu0 %v2107
  %2137 = vmatprep.subr.bf16.mxu0 0
  %2138 = vmatpush1.bf16.msra.mxu0 %v2106
  %2139 = vmatprep.subr.bf16.mxu0 0
  %2140 = vmatpush1.bf16.msra.mxu0 %v2105
  %2141 = vmatprep.subr.bf16.mxu0 0
  %2142 = vmatpush1.bf16.msra.mxu0 %v2104
  %2143 = vmatprep.subr.bf16.mxu0 0
  %2144 = vmatpush1.bf16.msra.mxu0 %v2103
  %2145 = vmatprep.subr.bf16.mxu0 0
  %2146 = vmatpush1.bf16.msra.mxu0 %v2102
  %2147 = vmatprep.subr.bf16.mxu0 0
  %2148 = vmatpush1.bf16.msra.mxu0 %v2101
  %2149 = vmatprep.subr.bf16.mxu0 0
  %2150 = vmatpush2.bf16.msra.mxu0 %v2116
  %2151 = vmatprep.subr.bf16.mxu0 0
  %2152 = vmatpush2.bf16.msra.mxu0 %v2115
  %2153 = vmatprep.subr.bf16.mxu0 0
  %2154 = vmatpush2.bf16.msra.mxu0 %v2114
  %2155 = vmatprep.subr.bf16.mxu0 0
  %2156 = vmatpush2.bf16.msra.mxu0 %v2113
  %2157 = vmatprep.subr.bf16.mxu0 0
  %2158 = vmatpush2.bf16.msra.mxu0 %v2112
  %2159 = vmatprep.subr.bf16.mxu0 0
  %2160 = vmatpush2.bf16.msra.mxu0 %v2111
  %2161 = vmatprep.subr.bf16.mxu0 0
  %2162 = vmatpush2.bf16.msra.mxu0 %v2110
  %2163 = vmatprep.subr.bf16.mxu0 0
  %2164 = vmatpush2.bf16.msra.mxu0 %v2109
  %2165 = vmatprep.mubr.bf16.mxu0 %v1997
  %2166 = vmatmul.mubr.bf16.gmra.mxu0 %v1996
  %v2167 = vpop.f32.mrf.mxu0
  %v2168 = vadd.f32 %v2035, %v2167
  %v2169 = vpop.f32.mrf.mxu0
  %v2170 = vpop.f32.mrf.mxu0
  %v2171 = vadd.f32 %v2035, %v2170
  %v2172 = vpop.f32.mrf.mxu0
  %2173 = vdwg.mxu0
  %v2174 = vmax.f32 %v2168, 0.0
  %v2175 = vmax.f32 %v2171, 0.0
  %v2176 = vld [vmem:[%s1] sm:$0xff]
  %v2177 = vld [vmem:[%s1 + $0x8] sm:$0xff]
  %v2178 = vld [vmem:[%s1 + $0x10] sm:$0xff]
  %v2179 = vld [vmem:[%s1 + $0x18] sm:$0xff]
  %v2180 = vld [vmem:[%s1 + $0x20] sm:$0xff]
  %v2181 = vld [vmem:[%s1 + $0x28] sm:$0xff]
  %v2188 = vunpack.c.l.b16 %v2176
  %v2189 = vunpack.c.h.b16 %v2176
  %v2190 = vunpack.c.l.b16 %v2177
  %v2191 = vunpack.c.h.b16 %v2177
  %v2192 = vunpack.c.l.b16 %v2178
  %v2193 = vunpack.c.h.b16 %v2178
  %v2194 = vunpack.c.l.b16 %v2179
  %v2195 = vunpack.c.h.b16 %v2179
  %v2196 = vunpack.c.l.b16 %v2180
  %v2197 = vunpack.c.h.b16 %v2180
  %v2198 = vunpack.c.l.b16 %v2181
  %v2199 = vunpack.c.h.b16 %v2181
  %v2200 = vpack.c.b16 %v2194, %v2188
  %v2201 = vpack.c.b16 %v2195, %v2189
  %v2202 = vpack.c.b16 %v2196, %v2190
  %v2203 = vpack.c.b16 %v2197, %v2191
  %v2204 = vpack.c.b16 %v2198, %v2192
  %v2205 = vpack.c.b16 %v2199, %v2193
  %2212 = vmatprep.subr.bf16.mxu0 %v885
  %2213 = vmatpush1.bf16.msra.mxu0 %v884
  %2214 = vmatprep.subr.bf16.mxu0 %v881
  %2215 = vmatpush1.bf16.msra.mxu0 %v880
  %2216 = vmatprep.subr.bf16.mxu0 %v877
  %2217 = vmatpush1.bf16.msra.mxu0 %v876
  %2218 = vmatprep.subr.bf16.mxu0 %v873
  %2219 = vmatpush1.bf16.msra.mxu0 %v872
  %2220 = vmatprep.subr.bf16.mxu0 %v869
  %2221 = vmatpush1.bf16.msra.mxu0 %v868
  %2222 = vmatprep.subr.bf16.mxu0 %v865
  %2223 = vmatpush1.bf16.msra.mxu0 %v864
  %2224 = vmatprep.subr.bf16.mxu0 %v861
  %2225 = vmatpush1.bf16.msra.mxu0 %v860
  %2226 = vmatprep.subr.bf16.mxu0 %v857
  %2227 = vmatpush1.bf16.msra.mxu0 %v856
  %2228 = vmatprep.subr.bf16.mxu0 %v917
  %2229 = vmatpush2.bf16.msra.mxu0 %v916
  %2230 = vmatprep.subr.bf16.mxu0 %v913
  %2231 = vmatpush2.bf16.msra.mxu0 %v912
  %2232 = vmatprep.subr.bf16.mxu0 %v909
  %2233 = vmatpush2.bf16.msra.mxu0 %v908
  %2234 = vmatprep.subr.bf16.mxu0 %v905
  %2235 = vmatpush2.bf16.msra.mxu0 %v904
  %2236 = vmatprep.subr.bf16.mxu0 %v901
  %2237 = vmatpush2.bf16.msra.mxu0 %v900
  %2238 = vmatprep.subr.bf16.mxu0 %v897
  %2239 = vmatpush2.bf16.msra.mxu0 %v896
  %2240 = vmatprep.subr.bf16.mxu0 %v893
  %2241 = vmatpush2.bf16.msra.mxu0 %v892
  %2242 = vmatprep.subr.bf16.mxu0 %v889
  %2243 = vmatpush2.bf16.msra.mxu0 %v888
  %2244 = vmatprep.mubr.bf16.mxu0 %v2201
  %2245 = vmatmul.mubr.bf16.gmra.mxu0 %v2200
  %v2246 = vpop.f32.mrf.mxu0
  %v2247 = vadd.f32 %v233, %v2246
  %v2248 = vpop.f32.mrf.mxu0
  %v2249 = vadd.f32 %v237, %v2248
  %v2250 = vpop.f32.mrf.mxu0
  %v2251 = vadd.f32 %v233, %v2250
  %v2252 = vpop.f32.mrf.mxu0
  %v2253 = vadd.f32 %v237, %v2252
  %2254 = vdwg.mxu0
  %2255 = vmatprep.subr.bf16.mxu0 %v949
  %2256 = vmatpush1.bf16.msra.mxu0 %v948
  %2257 = vmatprep.subr.bf16.mxu0 %v945
  %2258 = vmatpush1.bf16.msra.mxu0 %v944
  %2259 = vmatprep.subr.bf16.mxu0 %v941
  %2260 = vmatpush1.bf16.msra.mxu0 %v940
  %2261 = vmatprep.subr.bf16.mxu0 %v937
  %2262 = vmatpush1.bf16.msra.mxu0 %v936
  %2263 = vmatprep.subr.bf16.mxu0 %v933
  %2264 = vmatpush1.bf16.msra.mxu0 %v932
  %2265 = vmatprep.subr.bf16.mxu0 %v929
  %2266 = vmatpush1.bf16.msra.mxu0 %v928
  %2267 = vmatprep.subr.bf16.mxu0 %v925
  %2268 = vmatpush1.bf16.msra.mxu0 %v924
  %2269 = vmatprep.subr.bf16.mxu0 %v921
  %2270 = vmatpush1.bf16.msra.mxu0 %v920
  %2271 = vmatprep.subr.bf16.mxu0 %v981
  %2272 = vmatpush2.bf16.msra.mxu0 %v980
  %2273 = vmatprep.subr.bf16.mxu0 %v977
  %2274 = vmatpush2.bf16.msra.mxu0 %v976
  %2275 = vmatprep.subr.bf16.mxu0 %v973
  %2276 = vmatpush2.bf16.msra.mxu0 %v972
  %2277 = vmatprep.subr.bf16.mxu0 %v969
  %2278 = vmatpush2.bf16.msra.mxu0 %v968
  %2279 = vmatprep.subr.bf16.mxu0 %v965
  %2280 = vmatpush2.bf16.msra.mxu0 %v964
  %2281 = vmatprep.subr.bf16.mxu0 %v961
  %2282 = vmatpush2.bf16.msra.mxu0 %v960
  %2283 = vmatprep.subr.bf16.mxu0 %v957
  %2284 = vmatpush2.bf16.msra.mxu0 %v956
  %2285 = vmatprep.subr.bf16.mxu0 %v953
  %2286 = vmatpush2.bf16.msra.mxu0 %v952
  %2287 = vmatprep.mubr.bf16.mxu0 %v2203
  %2288 = vmatmul.mubr.bf16.gmra.mxu0 %v2202
  %v2289 = vpop.f32.mrf.mxu0
  %v2290 = vadd.f32 %v2247, %v2289
  %v2291 = vpop.f32.mrf.mxu0
  %v2292 = vadd.f32 %v2249, %v2291
  %v2293 = vpop.f32.mrf.mxu0
  %v2294 = vadd.f32 %v2251, %v2293
  %v2295 = vpop.f32.mrf.mxu0
  %v2296 = vadd.f32 %v2253, %v2295
  %2297 = vdwg.mxu0
  %2298 = vmatprep.subr.bf16.mxu0 %v1013
  %2299 = vmatpush1.bf16.msra.mxu0 %v1012
  %2300 = vmatprep.subr.bf16.mxu0 %v1009
  %2301 = vmatpush1.bf16.msra.mxu0 %v1008
  %2302 = vmatprep.subr.bf16.mxu0 %v1005
  %2303 = vmatpush1.bf16.msra.mxu0 %v1004
  %2304 = vmatprep.subr.bf16.mxu0 %v1001
  %2305 = vmatpush1.bf16.msra.mxu0 %v1000
  %2306 = vmatprep.subr.bf16.mxu0 %v997
  %2307 = vmatpush1.bf16.msra.mxu0 %v996
  %2308 = vmatprep.subr.bf16.mxu0 %v993
  %2309 = vmatpush1.bf16.msra.mxu0 %v992
  %2310 = vmatprep.subr.bf16.mxu0 %v989
  %2311 = vmatpush1.bf16.msra.mxu0 %v988
  %2312 = vmatprep.subr.bf16.mxu0 %v985
  %2313 = vmatpush1.bf16.msra.mxu0 %v984
  %2314 = vmatprep.subr.bf16.mxu0 %v1045
  %2315 = vmatpush2.bf16.msra.mxu0 %v1044
  %2316 = vmatprep.subr.bf16.mxu0 %v1041
  %2317 = vmatpush2.bf16.msra.mxu0 %v1040
  %2318 = vmatprep.subr.bf16.mxu0 %v1037
  %2319 = vmatpush2.bf16.msra.mxu0 %v1036
  %2320 = vmatprep.subr.bf16.mxu0 %v1033
  %2321 = vmatpush2.bf16.msra.mxu0 %v1032
  %2322 = vmatprep.subr.bf16.mxu0 %v1029
  %2323 = vmatpush2.bf16.msra.mxu0 %v1028
  %2324 = vmatprep.subr.bf16.mxu0 %v1025
  %2325 = vmatpush2.bf16.msra.mxu0 %v1024
  %2326 = vmatprep.subr.bf16.mxu0 %v1021
  %2327 = vmatpush2.bf16.msra.mxu0 %v1020
  %2328 = vmatprep.subr.bf16.mxu0 %v1017
  %2329 = vmatpush2.bf16.msra.mxu0 %v1016
  %2330 = vmatprep.mubr.bf16.mxu0 %v2205
  %2331 = vmatmul.mubr.bf16.gmra.mxu0 %v2204
  %v2332 = vpop.f32.mrf.mxu0
  %v2333 = vadd.f32 %v2290, %v2332
  %v2334 = vpop.f32.mrf.mxu0
  %v2335 = vadd.f32 %v2292, %v2334
  %v2336 = vpop.f32.mrf.mxu0
  %v2337 = vadd.f32 %v2294, %v2336
  %v2338 = vpop.f32.mrf.mxu0
  %v2339 = vadd.f32 %v2296, %v2338
  %2340 = vdwg.mxu0
  %2341 = vmatprep.subr.bf16.mxu0 %v887
  %2342 = vmatpush1.bf16.msra.mxu0 %v886
  %2343 = vmatprep.subr.bf16.mxu0 %v883
  %2344 = vmatpush1.bf16.msra.mxu0 %v882
  %2345 = vmatprep.subr.bf16.mxu0 %v879
  %2346 = vmatpush1.bf16.msra.mxu0 %v878
  %2347 = vmatprep.subr.bf16.mxu0 %v875
  %2348 = vmatpush1.bf16.msra.mxu0 %v874
  %2349 = vmatprep.subr.bf16.mxu0 %v871
  %2350 = vmatpush1.bf16.msra.mxu0 %v870
  %2351 = vmatprep.subr.bf16.mxu0 %v867
  %2352 = vmatpush1.bf16.msra.mxu0 %v866
  %2353 = vmatprep.subr.bf16.mxu0 %v863
  %2354 = vmatpush1.bf16.msra.mxu0 %v862
  %2355 = vmatprep.subr.bf16.mxu0 %v859
  %2356 = vmatpush1.bf16.msra.mxu0 %v858
  %2357 = vmatprep.subr.bf16.mxu0 %v919
  %2358 = vmatpush2.bf16.msra.mxu0 %v918
  %2359 = vmatprep.subr.bf16.mxu0 %v915
  %2360 = vmatpush2.bf16.msra.mxu0 %v914
  %2361 = vmatprep.subr.bf16.mxu0 %v911
  %2362 = vmatpush2.bf16.msra.mxu0 %v910
  %2363 = vmatprep.subr.bf16.mxu0 %v907
  %2364 = vmatpush2.bf16.msra.mxu0 %v906
  %2365 = vmatprep.subr.bf16.mxu0 %v903
  %2366 = vmatpush2.bf16.msra.mxu0 %v902
  %2367 = vmatprep.subr.bf16.mxu0 %v899
  %2368 = vmatpush2.bf16.msra.mxu0 %v898
  %2369 = vmatprep.subr.bf16.mxu0 %v895
  %2370 = vmatpush2.bf16.msra.mxu0 %v894
  %2371 = vmatprep.subr.bf16.mxu0 %v891
  %2372 = vmatpush2.bf16.msra.mxu0 %v890
  %2373 = vmatprep.mubr.bf16.mxu0 %v2201
  %2374 = vmatmul.mubr.bf16.gmra.mxu0 %v2200
  %v2375 = vpop.f32.mrf.mxu0
  %v2376 = vadd.f32 %v241, %v2375
  %v2377 = vpop.f32.mrf.mxu0
  %v2378 = vadd.f32 %v245, %v2377
  %v2379 = vpop.f32.mrf.mxu0
  %v2380 = vadd.f32 %v241, %v2379
  %v2381 = vpop.f32.mrf.mxu0
  %v2382 = vadd.f32 %v245, %v2381
  %2383 = vdwg.mxu0
  %2384 = vmatprep.subr.bf16.mxu0 %v951
  %2385 = vmatpush1.bf16.msra.mxu0 %v950
  %2386 = vmatprep.subr.bf16.mxu0 %v947
  %2387 = vmatpush1.bf16.msra.mxu0 %v946
  %2388 = vmatprep.subr.bf16.mxu0 %v943
  %2389 = vmatpush1.bf16.msra.mxu0 %v942
  %2390 = vmatprep.subr.bf16.mxu0 %v939
  %2391 = vmatpush1.bf16.msra.mxu0 %v938
  %2392 = vmatprep.subr.bf16.mxu0 %v935
  %2393 = vmatpush1.bf16.msra.mxu0 %v934
  %2394 = vmatprep.subr.bf16.mxu0 %v931
  %2395 = vmatpush1.bf16.msra.mxu0 %v930
  %2396 = vmatprep.subr.bf16.mxu0 %v927
  %2397 = vmatpush1.bf16.msra.mxu0 %v926
  %2398 = vmatprep.subr.bf16.mxu0 %v923
  %2399 = vmatpush1.bf16.msra.mxu0 %v922
  %2400 = vmatprep.subr.bf16.mxu0 %v983
  %2401 = vmatpush2.bf16.msra.mxu0 %v982
  %2402 = vmatprep.subr.bf16.mxu0 %v979
  %2403 = vmatpush2.bf16.msra.mxu0 %v978
  %2404 = vmatprep.subr.bf16.mxu0 %v975
  %2405 = vmatpush2.bf16.msra.mxu0 %v974
  %2406 = vmatprep.subr.bf16.mxu0 %v971
  %2407 = vmatpush2.bf16.msra.mxu0 %v970
  %2408 = vmatprep.subr.bf16.mxu0 %v967
  %2409 = vmatpush2.bf16.msra.mxu0 %v966
  %2410 = vmatprep.subr.bf16.mxu0 %v963
  %2411 = vmatpush2.bf16.msra.mxu0 %v962
  %2412 = vmatprep.subr.bf16.mxu0 %v959
  %2413 = vmatpush2.bf16.msra.mxu0 %v958
  %2414 = vmatprep.subr.bf16.mxu0 %v955
  %2415 = vmatpush2.bf16.msra.mxu0 %v954
  %2416 = vmatprep.mubr.bf16.mxu0 %v2203
  %2417 = vmatmul.mubr.bf16.gmra.mxu0 %v2202
  %v2418 = vpop.f32.mrf.mxu0
  %v2419 = vadd.f32 %v2376, %v2418
  %v2420 = vpop.f32.mrf.mxu0
  %v2421 = vadd.f32 %v2378, %v2420
  %v2422 = vpop.f32.mrf.mxu0
  %v2423 = vadd.f32 %v2380, %v2422
  %v2424 = vpop.f32.mrf.mxu0
  %v2425 = vadd.f32 %v2382, %v2424
  %2426 = vdwg.mxu0
  %2427 = vmatprep.subr.bf16.mxu0 %v1015
  %2428 = vmatpush1.bf16.msra.mxu0 %v1014
  %2429 = vmatprep.subr.bf16.mxu0 %v1011
  %2430 = vmatpush1.bf16.msra.mxu0 %v1010
  %2431 = vmatprep.subr.bf16.mxu0 %v1007
  %2432 = vmatpush1.bf16.msra.mxu0 %v1006
  %2433 = vmatprep.subr.bf16.mxu0 %v1003
  %2434 = vmatpush1.bf16.msra.mxu0 %v1002
  %2435 = vmatprep.subr.bf16.mxu0 %v999
  %2436 = vmatpush1.bf16.msra.mxu0 %v998
  %2437 = vmatprep.subr.bf16.mxu0 %v995
  %2438 = vmatpush1.bf16.msra.mxu0 %v994
  %2439 = vmatprep.subr.bf16.mxu0 %v991
  %2440 = vmatpush1.bf16.msra.mxu0 %v990
  %2441 = vmatprep.subr.bf16.mxu0 %v987
  %2442 = vmatpush1.bf16.msra.mxu0 %v986
  %2443 = vmatprep.subr.bf16.mxu0 %v1047
  %2444 = vmatpush2.bf16.msra.mxu0 %v1046
  %2445 = vmatprep.subr.bf16.mxu0 %v1043
  %2446 = vmatpush2.bf16.msra.mxu0 %v1042
  %2447 = vmatprep.subr.bf16.mxu0 %v1039
  %2448 = vmatpush2.bf16.msra.mxu0 %v1038
  %2449 = vmatprep.subr.bf16.mxu0 %v1035
  %2450 = vmatpush2.bf16.msra.mxu0 %v1034
  %2451 = vmatprep.subr.bf16.mxu0 %v1031
  %2452 = vmatpush2.bf16.msra.mxu0 %v1030
  %2453 = vmatprep.subr.bf16.mxu0 %v1027
  %2454 = vmatpush2.bf16.msra.mxu0 %v1026
  %2455 = vmatprep.subr.bf16.mxu0 %v1023
  %2456 = vmatpush2.bf16.msra.mxu0 %v1022
  %2457 = vmatprep.subr.bf16.mxu0 %v1019
  %2458 = vmatpush2.bf16.msra.mxu0 %v1018
  %2459 = vmatprep.mubr.bf16.mxu0 %v2205
  %2460 = vmatmul.mubr.bf16.gmra.mxu0 %v2204
  %v2461 = vpop.f32.mrf.mxu0
  %v2462 = vadd.f32 %v2419, %v2461
  %v2463 = vpop.f32.mrf.mxu0
  %v2464 = vadd.f32 %v2421, %v2463
  %v2465 = vpop.f32.mrf.mxu0
  %v2466 = vadd.f32 %v2423, %v2465
  %v2467 = vpop.f32.mrf.mxu0
  %v2468 = vadd.f32 %v2425, %v2467
  %2469 = vdwg.mxu0
  %v2470 = vmax.f32 %v2333, 0.0
  %v2471 = vmax.f32 %v2335, 0.0
  %v2472 = vmax.f32 %v2462, 0.0
  %v2473 = vmax.f32 %v2464, 0.0
  %v2474 = vmax.f32 %v2337, 0.0
  %v2475 = vmax.f32 %v2339, 0.0
  %v2476 = vmax.f32 %v2466, 0.0
  %v2477 = vmax.f32 %v2468, 0.0
  %v2478 = vpack.c.bf16 %v2474, %v2470
  %v2479 = vpack.c.bf16 %v2475, %v2471
  %v2480 = vpack.c.bf16 %v2476, %v2472
  %v2481 = vpack.c.bf16 %v2477, %v2473
  %2482 = vmatprep.subr.bf16.mxu0 %v1793
  %2483 = vmatpush1.bf16.msra.mxu0 %v1792
  %2484 = vmatprep.subr.bf16.mxu0 %v1791
  %2485 = vmatpush1.bf16.msra.mxu0 %v1790
  %2486 = vmatprep.subr.bf16.mxu0 %v1789
  %2487 = vmatpush1.bf16.msra.mxu0 %v1788
  %2488 = vmatprep.subr.bf16.mxu0 %v1787
  %2489 = vmatpush1.bf16.msra.mxu0 %v1786
  %2490 = vmatprep.subr.bf16.mxu0 %v1785
  %2491 = vmatpush1.bf16.msra.mxu0 %v1784
  %2492 = vmatprep.subr.bf16.mxu0 %v1783
  %2493 = vmatpush1.bf16.msra.mxu0 %v1782
  %2494 = vmatprep.subr.bf16.mxu0 %v1781
  %2495 = vmatpush1.bf16.msra.mxu0 %v1780
  %2496 = vmatprep.subr.bf16.mxu0 %v1779
  %2497 = vmatpush1.bf16.msra.mxu0 %v1778
  %2498 = vmatprep.subr.bf16.mxu0 %v1809
  %2499 = vmatpush2.bf16.msra.mxu0 %v1808
  %2500 = vmatprep.subr.bf16.mxu0 %v1807
  %2501 = vmatpush2.bf16.msra.mxu0 %v1806
  %2502 = vmatprep.subr.bf16.mxu0 %v1805
  %2503 = vmatpush2.bf16.msra.mxu0 %v1804
  %2504 = vmatprep.subr.bf16.mxu0 %v1803
  %2505 = vmatpush2.bf16.msra.mxu0 %v1802
  %2506 = vmatprep.subr.bf16.mxu0 %v1801
  %2507 = vmatpush2.bf16.msra.mxu0 %v1800
  %2508 = vmatprep.subr.bf16.mxu0 %v1799
  %2509 = vmatpush2.bf16.msra.mxu0 %v1798
  %2510 = vmatprep.subr.bf16.mxu0 %v1797
  %2511 = vmatpush2.bf16.msra.mxu0 %v1796
  %2512 = vmatprep.subr.bf16.mxu0 %v1795
  %2513 = vmatpush2.bf16.msra.mxu0 %v1794
  %2514 = vmatprep.mubr.bf16.mxu0 %v2479
  %2515 = vmatmul.mubr.bf16.gmra.mxu0 %v2478
  %v2516 = vpop.f32.mrf.mxu0
  %v2517 = vadd.f32 %v1579, %v2516
  %v2518 = vpop.f32.mrf.mxu0
  %v2519 = vadd.f32 %v1583, %v2518
  %v2520 = vpop.f32.mrf.mxu0
  %v2521 = vadd.f32 %v1579, %v2520
  %v2522 = vpop.f32.mrf.mxu0
  %v2523 = vadd.f32 %v1583, %v2522
  %2524 = vdwg.mxu0
  %2525 = vmatprep.subr.bf16.mxu0 %v1825
  %2526 = vmatpush1.bf16.msra.mxu0 %v1824
  %2527 = vmatprep.subr.bf16.mxu0 %v1823
  %2528 = vmatpush1.bf16.msra.mxu0 %v1822
  %2529 = vmatprep.subr.bf16.mxu0 %v1821
  %2530 = vmatpush1.bf16.msra.mxu0 %v1820
  %2531 = vmatprep.subr.bf16.mxu0 %v1819
  %2532 = vmatpush1.bf16.msra.mxu0 %v1818
  %2533 = vmatprep.subr.bf16.mxu0 %v1817
  %2534 = vmatpush1.bf16.msra.mxu0 %v1816
  %2535 = vmatprep.subr.bf16.mxu0 %v1815
  %2536 = vmatpush1.bf16.msra.mxu0 %v1814
  %2537 = vmatprep.subr.bf16.mxu0 %v1813
  %2538 = vmatpush1.bf16.msra.mxu0 %v1812
  %2539 = vmatprep.subr.bf16.mxu0 %v1811
  %2540 = vmatpush1.bf16.msra.mxu0 %v1810
  %2541 = vmatprep.subr.bf16.mxu0 %v1841
  %2542 = vmatpush2.bf16.msra.mxu0 %v1840
  %2543 = vmatprep.subr.bf16.mxu0 %v1839
  %2544 = vmatpush2.bf16.msra.mxu0 %v1838
  %2545 = vmatprep.subr.bf16.mxu0 %v1837
  %2546 = vmatpush2.bf16.msra.mxu0 %v1836
  %2547 = vmatprep.subr.bf16.mxu0 %v1835
  %2548 = vmatpush2.bf16.msra.mxu0 %v1834
  %2549 = vmatprep.subr.bf16.mxu0 %v1833
  %2550 = vmatpush2.bf16.msra.mxu0 %v1832
  %2551 = vmatprep.subr.bf16.mxu0 %v1831
  %2552 = vmatpush2.bf16.msra.mxu0 %v1830
  %2553 = vmatprep.subr.bf16.mxu0 %v1829
  %2554 = vmatpush2.bf16.msra.mxu0 %v1828
  %2555 = vmatprep.subr.bf16.mxu0 %v1827
  %2556 = vmatpush2.bf16.msra.mxu0 %v1826
  %2557 = vmatprep.mubr.bf16.mxu0 %v2481
  %2558 = vmatmul.mubr.bf16.gmra.mxu0 %v2480
  %v2559 = vpop.f32.mrf.mxu0
  %v2560 = vadd.f32 %v2517, %v2559
  %v2561 = vpop.f32.mrf.mxu0
  %v2562 = vadd.f32 %v2519, %v2561
  %v2563 = vpop.f32.mrf.mxu0
  %v2564 = vadd.f32 %v2521, %v2563
  %v2565 = vpop.f32.mrf.mxu0
  %v2566 = vadd.f32 %v2523, %v2565
  %2567 = vdwg.mxu0
  %v2568 = vmax.f32 %v2560, 0.0
  %v2569 = vmax.f32 %v2562, 0.0
  %v2570 = vmax.f32 %v2564, 0.0
  %v2571 = vmax.f32 %v2566, 0.0
  %v2572 = vpack.c.bf16 %v2570, %v2568
  %v2573 = vpack.c.bf16 %v2571, %v2569
  %2574 = vmatprep.subr.bf16.mxu0 0
  %2575 = vmatpush1.bf16.msra.mxu0 %v2108
  %2576 = vmatprep.subr.bf16.mxu0 0
  %2577 = vmatpush1.bf16.msra.mxu0 %v2107
  %2578 = vmatprep.subr.bf16.mxu0 0
  %2579 = vmatpush1.bf16.msra.mxu0 %v2106
  %2580 = vmatprep.subr.bf16.mxu0 0
  %2581 = vmatpush1.bf16.msra.mxu0 %v2105
  %2582 = vmatprep.subr.bf16.mxu0 0
  %2583 = vmatpush1.bf16.msra.mxu0 %v2104
  %2584 = vmatprep.subr.bf16.mxu0 0
  %2585 = vmatpush1.bf16.msra.mxu0 %v2103
  %2586 = vmatprep.subr.bf16.mxu0 0
  %2587 = vmatpush1.bf16.msra.mxu0 %v2102
  %2588 = vmatprep.subr.bf16.mxu0 0
  %2589 = vmatpush1.bf16.msra.mxu0 %v2101
  %2590 = vmatprep.subr.bf16.mxu0 0
  %2591 = vmatpush2.bf16.msra.mxu0 %v2116
  %2592 = vmatprep.subr.bf16.mxu0 0
  %2593 = vmatpush2.bf16.msra.mxu0 %v2115
  %2594 = vmatprep.subr.bf16.mxu0 0
  %2595 = vmatpush2.bf16.msra.mxu0 %v2114
  %2596 = vmatprep.subr.bf16.mxu0 0
  %2597 = vmatpush2.bf16.msra.mxu0 %v2113
  %2598 = vmatprep.subr.bf16.mxu0 0
  %2599 = vmatpush2.bf16.msra.mxu0 %v2112
  %2600 = vmatprep.subr.bf16.mxu0 0
  %2601 = vmatpush2.bf16.msra.mxu0 %v2111
  %2602 = vmatprep.subr.bf16.mxu0 0
  %2603 = vmatpush2.bf16.msra.mxu0 %v2110
  %2604 = vmatprep.subr.bf16.mxu0 0
  %2605 = vmatpush2.bf16.msra.mxu0 %v2109
  %2606 = vmatprep.mubr.bf16.mxu0 %v2573
  %2607 = vmatmul.mubr.bf16.gmra.mxu0 %v2572
  %v2608 = vpop.f32.mrf.mxu0
  %v2609 = vadd.f32 %v2035, %v2608
  %v2610 = vpop.f32.mrf.mxu0
  %v2611 = vpop.f32.mrf.mxu0
  %v2612 = vadd.f32 %v2035, %v2611
  %v2613 = vpop.f32.mrf.mxu0
  %2614 = vdwg.mxu0
  %v2615 = vmax.f32 %v2609, 0.0
  %v2616 = vmax.f32 %v2612, 0.0
  %v2617 = vmul.f32 %v2174, %v2615
  %v2618 = vmul.f32 %v2175, %v2616
  %2619 = vadd.xlane.f32.xlu0 %v2617
  %v2620 = vpop.xlane.xlu0 %2619
  %2621 = vadd.xlane.f32.xlu0 %v2618
  %v2622 = vpop.xlane.xlu0 %2621
  %v2623 = vmul.f32 %v2174, %v2174
  %v2624 = vmul.f32 %v2175, %v2175
  %2625 = vadd.xlane.f32.xlu0 %v2623
  %v2626 = vpop.xlane.xlu0 %2625
  %2627 = vadd.xlane.f32.xlu0 %v2624
  %v2628 = vpop.xlane.xlu0 %2627
  %v2629 = vmul.f32 %v2615, %v2615
  %v2630 = vmul.f32 %v2616, %v2616
  %2631 = vadd.xlane.f32.xlu0 %v2629
  %v2632 = vpop.xlane.xlu0 %2631
  %2633 = vadd.xlane.f32.xlu0 %v2630
  %v2634 = vpop.xlane.xlu0 %2633
  %v2635 = vmax.f32 %v2626, 1e-16
  %v2636 = vmax.f32 %v2628, 1e-16
  %v2637 = vmax.f32 %v2632, 1e-16
  %v2638 = vmax.f32 %v2634, 1e-16
  %v2639 = vmul.f32 %v2635, %v2637
  %v2640 = vmul.f32 %v2636, %v2638
  %v2641 = vrsqrt.pop %v2639
  %v2642 = vrsqrt.pop %v2640
  %v2643 = vmul.f32 %v2620, %v2641
  %v2644 = vmul.f32 %v2622, %v2642
  %vm2645 = vcmask 7168
  %2646 = vst.msk [vmem:[%s8] sm:$0xff] %vm2645, %v2643
  %2647 = vst.msk [vmem:[%s8 + $0x8] sm:$0xff] %vm2645, %v2644
  // Predicated region
  $region34: #{bert_similarity.1} parent=0 // pred_check
    _
  $region35: #{bert_similarity.1} parent=0 // pred_check_branch
    %2649 = sbr.rel (0) target = $region37
  $region36: #{bert_similarity.1} parent=0 // pred_region
    _
  $region37: #{bert_similarity.1} parent=0 // pred_fallthru
    _
  // Predicated region
  $region38: #{bert_similarity.1} parent=0 // pred_check
    _
  $region39: #{bert_similarity.1} parent=0 // pred_check_branch
    %2651 = sbr.rel (0) target = $region41
  $region40: #{bert_similarity.1} parent=0 // pred_region
    _
  $region41: #{bert_similarity.1} parent=0 // pred_fallthru
    _

</llo_original>
